<compile_context>
chip_gen: v7x
topology: tpu7x:2x2x1
jax: 0.10.0
libtpu: 0.0.40
codegen_flags: <defaults>
</compile_context>

<pallas_src>
import jax
import jax.numpy as jnp
from jax.experimental import pallas as pl
from jax.experimental.pallas import tpu as pltpu

# CartPole-v1: observation dim = 4, action dim = 2
STATE_DIM = 4
ACTION_DIM = 2
H1, H2, H3 = 256, 256, 128
OUT_PAD = 128          # lane-dense padded output width (last layer)

MIN_TILE = 16          # row multiple safe for bf16 sublane packing (and f32)
MAX_TILE = 4096        # cap so double-buffered (tb, 128) f32 out tile stays small


def _round_up(n, m):
    return ((n + m - 1) // m) * m


def _num_tensorcores():
    """Best-effort TensorCore count per chip: 2 on v7x, 1 on v5e/v6e."""
    try:
        kind = getattr(jax.devices()[0], "device_kind", "").lower()
        if "v7" in kind or "7x" in kind:
            return 2
    except Exception:
        pass
    return 1


def _resident_spec(shape, index_map):
    """BlockSpec for a VMEM-resident operand (constant index_map).

    Single-buffer it (its block index never changes) so the pipeline's
    double-buffering budget goes to the x / out tiles.  Falls back to a plain
    BlockSpec if pipeline_mode / pl.Buffered is unavailable.
    """
    try:
        return pl.BlockSpec(shape, index_map, pipeline_mode=pl.Buffered(1))
    except Exception:
        return pl.BlockSpec(shape, index_map)


def qnet_kernel(x_ref, w1_ref, b1_ref, w2_ref, b2_ref,
                w3_ref, b3_ref, w4_ref, b4_ref, o_ref):
    # Whole MLP for one (tb, STATE_DIM) bf16 batch tile.  Weights are bf16 and
    # stay resident in VMEM across grid steps (constant index_map); matmuls
    # accumulate in f32 on the MXU, bias-add/ReLU run on the f32 accumulator,
    # downcast to bf16 only to feed the next MXU push.
    x = x_ref[...]                                                     # bf16

    h = jnp.dot(x, w1_ref[...], preferred_element_type=jnp.float32) + b1_ref[...]
    h = jnp.maximum(h, 0.0).astype(jnp.bfloat16)

    h = jnp.dot(h, w2_ref[...], preferred_element_type=jnp.float32) + b2_ref[...]
    h = jnp.maximum(h, 0.0).astype(jnp.bfloat16)

    h = jnp.dot(h, w3_ref[...], preferred_element_type=jnp.float32) + b3_ref[...]
    h = jnp.maximum(h, 0.0).astype(jnp.bfloat16)

    out = jnp.dot(h, w4_ref[...], preferred_element_type=jnp.float32) + b4_ref[...]
    o_ref[...] = out.astype(o_ref.dtype)             # (tb, 128) lane-dense store


def qnetwork_forward(x, prepared_params, *, num_cores=None):
    """x: (B, STATE_DIM) float -> (B, ACTION_DIM) float32.

    prepared_params: (w1,b1,w2,b2,w3,b3,w4p,b4p) with bf16 weights shaped
    (in, out), f32 biases shaped (1, out), last layer zero-padded to OUT_PAD.
    """
    w1, b1, w2, b2, w3, b3, w4p, b4p = prepared_params
    B = x.shape[0]
    if num_cores is None:
        num_cores = _num_tensorcores()

    # ---- adaptive batch tiling -------------------------------------------
    Bp = _round_up(max(B, MIN_TILE), MIN_TILE)
    if num_cores > 1 and Bp >= 2 * 256:
        # v7x replay batches: exactly one "parallel" tile per TensorCore.
        Bp = _round_up(Bp, num_cores * MIN_TILE)
        tb = Bp // num_cores
    else:
        # v5e/v6e and tiny acting batches: one tile, grid=(1,), no per-step
        # pipeline overhead.
        tb = Bp
    tb = min(tb, MAX_TILE)
    Bp = _round_up(Bp, tb)
    n_tiles = Bp // tb

    # Pre-cast x to bf16 (halves x DMA, removes per-tile in-kernel cast).
    x = x.astype(jnp.bfloat16)
    if Bp != B:
        x = jnp.pad(x, ((0, Bp - B), (0, 0)))

    # Weights/biases: constant index_map -> DMA'd once, pinned in VMEM.
    const2 = lambda i: (0, 0)

    w_bytes = ((w1.size + w2.size + w3.size + w4p.size) * 2
               + (b1.size + b2.size + b3.size + b4p.size) * 4)
    cost = pl.CostEstimate(
        flops=2 * Bp * (STATE_DIM * H1 + H1 * H2 + H2 * H3 + H3 * OUT_PAD),
        transcendentals=0,
        bytes_accessed=Bp * STATE_DIM * 2 + w_bytes + Bp * OUT_PAD * 4,
    )

    out_padded = pl.pallas_call(
        qnet_kernel,
        out_shape=jax.ShapeDtypeStruct((Bp, OUT_PAD), jnp.float32),
        grid_spec=pltpu.PrefetchScalarGridSpec(
            num_scalar_prefetch=0,
            grid=(n_tiles,),
            in_specs=[
                pl.BlockSpec((tb, STATE_DIM), lambda i: (i, 0)),   # x tile
                _resident_spec((STATE_DIM, H1), const2),           # w1
                _resident_spec((1, H1), const2),                   # b1
                _resident_spec((H1, H2), const2),                  # w2
                _resident_spec((1, H2), const2),                   # b2
                _resident_spec((H2, H3), const2),                  # w3
                _resident_spec((1, H3), const2),                   # b3
                _resident_spec((H3, OUT_PAD), const2),             # w4 (padded)
                _resident_spec((1, OUT_PAD), const2),              # b4 (padded)
            ],
            out_specs=pl.BlockSpec((tb, OUT_PAD), lambda i: (i, 0)),
        ),
        compiler_params=pltpu.CompilerParams(
            dimension_semantics=("parallel",),   # shard batch tiles across TCs (v7x)
        ),
        cost_estimate=cost,
    )(x, w1, b1, w2, b2, w3, b3, w4p, b4p)

    return out_padded[:B, :ACTION_DIM]


def init_params(key):
    """PyTorch nn.Linear-style init (U(-1/sqrt(fan_in), +)), f32 master copy."""
    dims = [(STATE_DIM, H1), (H1, H2), (H2, H3), (H3, ACTION_DIM)]
    params = []
    for fan_in, fan_out in dims:
        key, kw, kb = jax.random.split(key, 3)
        bound = 1.0 / jnp.sqrt(float(fan_in))
        w = jax.random.uniform(kw, (fan_in, fan_out), jnp.float32, -bound, bound)
        b = jax.random.uniform(kb, (1, fan_out), jnp.float32, -bound, bound)
        params.extend([w, b])
    return tuple(params)


def prepare_params(params_f32):
    """Cast weights to bf16, keep biases f32, zero-pad last layer to OUT_PAD cols."""
    w1, b1, w2, b2, w3, b3, w4, b4 = params_f32
    w4p = jnp.zeros((H3, OUT_PAD), jnp.bfloat16).at[:, :ACTION_DIM].set(
        w4.astype(jnp.bfloat16))
    b4p = jnp.zeros((1, OUT_PAD), jnp.float32).at[:, :ACTION_DIM].set(b4)
    return (w1.astype(jnp.bfloat16), b1,
            w2.astype(jnp.bfloat16), b2,
            w3.astype(jnp.bfloat16), b3,
            w4p, b4p)


def reference_forward(x, prepared_params):
    """Pure-JAX reference following the same bf16-weight / f32-accumulate path.

    Note: bf16 weights / inter-layer activations deviate from a true f32
    PyTorch QNetwork at ~1e-2 relative level (fine for DQN); this reference
    validates the kernel against the matched bf16 path.
    """
    w1, b1, w2, b2, w3, b3, w4p, b4p = prepared_params
    h = x.astype(jnp.bfloat16)
    h = jnp.maximum(jnp.dot(h, w1, preferred_element_type=jnp.float32) + b1, 0.0)
    h = h.astype(jnp.bfloat16)
    h = jnp.maximum(jnp.dot(h, w2, preferred_element_type=jnp.float32) + b2, 0.0)
    h = h.astype(jnp.bfloat16)
    h = jnp.maximum(jnp.dot(h, w3, preferred_element_type=jnp.float32) + b3, 0.0)
    h = h.astype(jnp.bfloat16)
    out = jnp.dot(h, w4p, preferred_element_type=jnp.float32) + b4p
    return out[:, :ACTION_DIM]


if __name__ == "__main__":
    key = jax.random.PRNGKey(0)
    key, kx_big, kx_small, kx_odd = jax.random.split(key, 4)

    params = prepare_params(init_params(key))
    fwd = jax.jit(qnetwork_forward)

    # Replay-minibatch-sized batch: grid=(1,) on v5e/v6e, 2 parallel tiles on v7x.
    B_big = 512
    x_big = jax.random.normal(kx_big, (B_big, STATE_DIM), jnp.float32)
    out_big = jax.block_until_ready(fwd(x_big, params))
    ref_big = reference_forward(x_big, params)
    assert out_big.shape == (B_big, ACTION_DIM)
    assert jnp.allclose(out_big, ref_big, atol=1e-3, rtol=1e-3), "mismatch (B=512)"

    # Tiny online-acting batch: single 16-row tile (no 256-row padding).
    B_small = 8
    x_small = jax.random.normal(kx_small, (B_small, STATE_DIM), jnp.float32)
    out_small = jax.block_until_ready(fwd(x_small, params))
    ref_small = reference_forward(x_small, params)
    assert out_small.shape == (B_small, ACTION_DIM)
    assert jnp.allclose(out_small, ref_small, atol=1e-3, rtol=1e-3), "mismatch (B=8)"

    # Odd batch size: exercises the padding path (5 -> 16 rows).
    B_odd = 5
    x_odd = jax.random.normal(kx_odd, (B_odd, STATE_DIM), jnp.float32)
    out_odd = jax.block_until_ready(fwd(x_odd, params))
    ref_odd = reference_forward(x_odd, params)
    assert out_odd.shape == (B_odd, ACTION_DIM)
    assert jnp.allclose(out_odd, ref_odd, atol=1e-3, rtol=1e-3), "mismatch (B=5)"

    print("KERNEL_OK")
</pallas_src>

<mosaic_0001>
module attributes {stable_mosaic.version = 11 : i64} {
  func.func @qnet_kernel(%arg0: i32, %arg1: memref<512x4xbf16, #tpu.memory_space<vmem>>, %arg2: memref<4x256xbf16, #tpu.memory_space<vmem>>, %arg3: memref<1x256xf32, #tpu.memory_space<vmem>>, %arg4: memref<256x256xbf16, #tpu.memory_space<vmem>>, %arg5: memref<1x256xf32, #tpu.memory_space<vmem>>, %arg6: memref<256x128xbf16, #tpu.memory_space<vmem>>, %arg7: memref<1x128xf32, #tpu.memory_space<vmem>>, %arg8: memref<128x128xbf16, #tpu.memory_space<vmem>>, %arg9: memref<1x128xf32, #tpu.memory_space<vmem>>, %arg10: memref<512x128xf32, #tpu.memory_space<vmem>>) attributes {dimension_semantics = [#tpu.dimension_semantics<parallel>], iteration_bounds = array<i64: 1>, scalar_prefetch = 0 : i64, scratch_operands = 0 : i64, tpu.core_type = #tpu.core_type<tc>, window_params = [{transform_indices = @transform_0, window_bounds = array<i64: 512, 4>}, {pipeline_mode = #tpu.pipeline_mode<synchronous>, transform_indices = @transform_1, window_bounds = array<i64: 4, 256>}, {pipeline_mode = #tpu.pipeline_mode<synchronous>, transform_indices = @transform_2, window_bounds = array<i64: 1, 256>}, {pipeline_mode = #tpu.pipeline_mode<synchronous>, transform_indices = @transform_3, window_bounds = array<i64: 256, 256>}, {pipeline_mode = #tpu.pipeline_mode<synchronous>, transform_indices = @transform_4, window_bounds = array<i64: 1, 256>}, {pipeline_mode = #tpu.pipeline_mode<synchronous>, transform_indices = @transform_5, window_bounds = array<i64: 256, 128>}, {pipeline_mode = #tpu.pipeline_mode<synchronous>, transform_indices = @transform_6, window_bounds = array<i64: 1, 128>}, {pipeline_mode = #tpu.pipeline_mode<synchronous>, transform_indices = @transform_7, window_bounds = array<i64: 128, 128>}, {pipeline_mode = #tpu.pipeline_mode<synchronous>, transform_indices = @transform_8, window_bounds = array<i64: 1, 128>}, {transform_indices = @transform_9, window_bounds = array<i64: 512, 128>}]} {
    %c0 = arith.constant 0 : index
    %c0_0 = arith.constant 0 : index
    %0 = vector.load %arg1[%c0, %c0_0] : memref<512x4xbf16, #tpu.memory_space<vmem>>, vector<512x4xbf16>
    %c0_1 = arith.constant 0 : index
    %c0_2 = arith.constant 0 : index
    %1 = vector.load %arg2[%c0_1, %c0_2] : memref<4x256xbf16, #tpu.memory_space<vmem>>, vector<4x256xbf16>
    %cst = arith.constant dense<0.000000e+00> : vector<512x256xf32>
    %2 = tpu.matmul %0, %1, %cst {dimension_numbers = #tpu.dot_dimension_numbers<[1], [0], [0], [1], [0, 0, 1, 1], [], []>} : vector<512x4xbf16>, vector<4x256xbf16>, vector<512x256xf32> -> vector<512x256xf32>
    %c0_3 = arith.constant 0 : index
    %c0_4 = arith.constant 0 : index
    %3 = vector.load %arg3[%c0_3, %c0_4] : memref<1x256xf32, #tpu.memory_space<vmem>>, vector<1x256xf32>
    %4 = vector.broadcast %3 : vector<1x256xf32> to vector<512x256xf32>
    %5 = arith.addf %2, %4 : vector<512x256xf32>
    %cst_5 = arith.constant 0.000000e+00 : f32
    %6 = vector.broadcast %cst_5 : f32 to vector<512x256xf32>
    %7 = arith.maximumf %5, %6 : vector<512x256xf32>
    %8 = arith.truncf %7 : vector<512x256xf32> to vector<512x256xbf16>
    %c0_6 = arith.constant 0 : index
    %c0_7 = arith.constant 0 : index
    %9 = vector.load %arg4[%c0_6, %c0_7] : memref<256x256xbf16, #tpu.memory_space<vmem>>, vector<256x256xbf16>
    %cst_8 = arith.constant dense<0.000000e+00> : vector<512x256xf32>
    %10 = tpu.matmul %8, %9, %cst_8 {dimension_numbers = #tpu.dot_dimension_numbers<[1], [0], [0], [1], [0, 0, 1, 1], [], []>} : vector<512x256xbf16>, vector<256x256xbf16>, vector<512x256xf32> -> vector<512x256xf32>
    %c0_9 = arith.constant 0 : index
    %c0_10 = arith.constant 0 : index
    %11 = vector.load %arg5[%c0_9, %c0_10] : memref<1x256xf32, #tpu.memory_space<vmem>>, vector<1x256xf32>
    %12 = vector.broadcast %11 : vector<1x256xf32> to vector<512x256xf32>
    %13 = arith.addf %10, %12 : vector<512x256xf32>
    %cst_11 = arith.constant 0.000000e+00 : f32
    %14 = vector.broadcast %cst_11 : f32 to vector<512x256xf32>
    %15 = arith.maximumf %13, %14 : vector<512x256xf32>
    %16 = arith.truncf %15 : vector<512x256xf32> to vector<512x256xbf16>
    %c0_12 = arith.constant 0 : index
    %c0_13 = arith.constant 0 : index
    %17 = vector.load %arg6[%c0_12, %c0_13] : memref<256x128xbf16, #tpu.memory_space<vmem>>, vector<256x128xbf16>
    %cst_14 = arith.constant dense<0.000000e+00> : vector<512x128xf32>
    %18 = tpu.matmul %16, %17, %cst_14 {dimension_numbers = #tpu.dot_dimension_numbers<[1], [0], [0], [1], [0, 0, 1, 1], [], []>} : vector<512x256xbf16>, vector<256x128xbf16>, vector<512x128xf32> -> vector<512x128xf32>
    %c0_15 = arith.constant 0 : index
    %c0_16 = arith.constant 0 : index
    %19 = vector.load %arg7[%c0_15, %c0_16] : memref<1x128xf32, #tpu.memory_space<vmem>>, vector<1x128xf32>
    %20 = vector.broadcast %19 : vector<1x128xf32> to vector<512x128xf32>
    %21 = arith.addf %18, %20 : vector<512x128xf32>
    %cst_17 = arith.constant 0.000000e+00 : f32
    %22 = vector.broadcast %cst_17 : f32 to vector<512x128xf32>
    %23 = arith.maximumf %21, %22 : vector<512x128xf32>
    %24 = arith.truncf %23 : vector<512x128xf32> to vector<512x128xbf16>
    %c0_18 = arith.constant 0 : index
    %c0_19 = arith.constant 0 : index
    %25 = vector.load %arg8[%c0_18, %c0_19] : memref<128x128xbf16, #tpu.memory_space<vmem>>, vector<128x128xbf16>
    %cst_20 = arith.constant dense<0.000000e+00> : vector<512x128xf32>
    %26 = tpu.matmul %24, %25, %cst_20 {dimension_numbers = #tpu.dot_dimension_numbers<[1], [0], [0], [1], [0, 0, 1, 1], [], []>} : vector<512x128xbf16>, vector<128x128xbf16>, vector<512x128xf32> -> vector<512x128xf32>
    %c0_21 = arith.constant 0 : index
    %c0_22 = arith.constant 0 : index
    %27 = vector.load %arg9[%c0_21, %c0_22] : memref<1x128xf32, #tpu.memory_space<vmem>>, vector<1x128xf32>
    %28 = vector.broadcast %27 : vector<1x128xf32> to vector<512x128xf32>
    %29 = arith.addf %26, %28 : vector<512x128xf32>
    %c0_23 = arith.constant 0 : index
    %c0_24 = arith.constant 0 : index
    %30 = vector.load %arg10[%c0_23, %c0_24] : memref<512x128xf32, #tpu.memory_space<vmem>>, vector<512x128xf32>
    tpu.vector_store %arg10[%c0_23, %c0_24], %29 {strides = array<i32>} : memref<512x128xf32, #tpu.memory_space<vmem>>, vector<512x128xf32>,
    return
  }
  func.func @transform_0(%arg0: i32) -> (i32, i32) {
    %c0_i32 = arith.constant 0 : i32
    %c0_i32_0 = arith.constant 0 : i32
    return %arg0, %c0_i32 : i32, i32
  }
  func.func @transform_1(%arg0: i32) -> (i32, i32) {
    %c0_i32 = arith.constant 0 : i32
    %c0_i32_0 = arith.constant 0 : i32
    %c0_i32_1 = arith.constant 0 : i32
    return %c0_i32, %c0_i32_0 : i32, i32
  }
  func.func @transform_2(%arg0: i32) -> (i32, i32) {
    %c0_i32 = arith.constant 0 : i32
    %c0_i32_0 = arith.constant 0 : i32
    %c0_i32_1 = arith.constant 0 : i32
    return %c0_i32, %c0_i32_0 : i32, i32
  }
  func.func @transform_3(%arg0: i32) -> (i32, i32) {
    %c0_i32 = arith.constant 0 : i32
    %c0_i32_0 = arith.constant 0 : i32
    %c0_i32_1 = arith.constant 0 : i32
    return %c0_i32, %c0_i32_0 : i32, i32
  }
  func.func @transform_4(%arg0: i32) -> (i32, i32) {
    %c0_i32 = arith.constant 0 : i32
    %c0_i32_0 = arith.constant 0 : i32
    %c0_i32_1 = arith.constant 0 : i32
    return %c0_i32, %c0_i32_0 : i32, i32
  }
  func.func @transform_5(%arg0: i32) -> (i32, i32) {
    %c0_i32 = arith.constant 0 : i32
    %c0_i32_0 = arith.constant 0 : i32
    %c0_i32_1 = arith.constant 0 : i32
    return %c0_i32, %c0_i32_0 : i32, i32
  }
  func.func @transform_6(%arg0: i32) -> (i32, i32) {
    %c0_i32 = arith.constant 0 : i32
    %c0_i32_0 = arith.constant 0 : i32
    %c0_i32_1 = arith.constant 0 : i32
    return %c0_i32, %c0_i32_0 : i32, i32
  }
  func.func @transform_7(%arg0: i32) -> (i32, i32) {
    %c0_i32 = arith.constant 0 : i32
    %c0_i32_0 = arith.constant 0 : i32
    %c0_i32_1 = arith.constant 0 : i32
    return %c0_i32, %c0_i32_0 : i32, i32
  }
  func.func @transform_8(%arg0: i32) -> (i32, i32) {
    %c0_i32 = arith.constant 0 : i32
    %c0_i32_0 = arith.constant 0 : i32
    %c0_i32_1 = arith.constant 0 : i32
    return %c0_i32, %c0_i32_0 : i32, i32
  }
  func.func @transform_9(%arg0: i32) -> (i32, i32) {
    %c0_i32 = arith.constant 0 : i32
    %c0_i32_0 = arith.constant 0 : i32
    return %arg0, %c0_i32 : i32, i32
  }
}

</mosaic_0001>

<llo_original>
// kernel: qnetwork_forward.1
$region0: #{qnetwork_forward.1}
  #allocation0 [shape = 'u32[]', space=smem, size = 0x4, offset = 0x4, fixed_abs, tag = 'smem constant byte address 0x4 - core index']
  #allocation1 [shape = 'u32[144,128]{1,0:T(1,128)}', space=vmem, size = 0x12000, scoped, tag = 'internal scratch']
  %s0 = inlined_call_operand.vmem [shape: bf16[512,4], index: 0, kind: input, shape index: {}]
  %s1 = inlined_call_operand.vmem [shape: bf16[4,256], index: 1, kind: input, shape index: {}]
  %s2 = inlined_call_operand.vmem [shape: f32[1,256], index: 2, kind: input, shape index: {}]
  %s3 = inlined_call_operand.vmem [shape: bf16[256,256], index: 3, kind: input, shape index: {}]
  %s4 = inlined_call_operand.vmem [shape: f32[1,256], index: 4, kind: input, shape index: {}]
  %s5 = inlined_call_operand.hbm [shape: bf16[256,128], index: 5, kind: input, shape index: {}]
  %s6 = inlined_call_operand.vmem [shape: f32[1,128], index: 6, kind: input, shape index: {}]
  %s7 = inlined_call_operand.hbm [shape: bf16[128,128], index: 7, kind: input, shape index: {}]
  %s8 = inlined_call_operand.vmem [shape: f32[1,128], index: 8, kind: input, shape index: {}]
  %s9 = inlined_call_operand.vmem [shape: f32[512,128], index: 9, kind: output, shape index: {}]
  %s10 = sld [smem:[#allocation0]]
  $region54: #{qnetwork_forward.1} parent=0
    _
  %s12 = ssub.s32 1, %s10
  %s13 = scalar_select 0, %s12, %s10
  $region1: #{qnetwork_forward.1} parent=0
    #allocation2 [shape = 'u8[65536]{0}', space=vmem, size = 0x10000, scoped, tag = 'input window, operand 5, single buffered']
    #allocation3 [shape = 's32[1]{0}', space=sflag, size = 0x4, scoped, tag = 'scoped memory for qnetwork_forward.1']
    #allocation4 [shape = 'u8[32768]{0}', space=vmem, size = 0x8000, scoped, tag = 'input window, operand 7, single buffered']
    #allocation5 [shape = 's32[1]{0}', space=sflag, size = 0x4, scoped, tag = 'scoped memory for qnetwork_forward.1']
    %14 = vsyncpa [#allocation3], 0
    %15 = vsyncpa [#allocation5], 0
    // Predicated region
    $region2: #{qnetwork_forward.1} parent=1 // pred_check
      _
    $region3: #{qnetwork_forward.1} parent=1 // pred_check_branch
      %17 = sbr.rel (0) target = $region5
    $region4: #{qnetwork_forward.1} parent=1 // pred_region
      _
    $region5: #{qnetwork_forward.1} parent=1 // pred_fallthru
      _
    // Predicated region
    $region6: #{qnetwork_forward.1} parent=1 // pred_check
      _
    $region7: #{qnetwork_forward.1} parent=1 // pred_check_branch
      %19 = sbr.rel (0) target = $region9
    $region8: #{qnetwork_forward.1} parent=1 // pred_region
      _
    $region9: #{qnetwork_forward.1} parent=1 // pred_fallthru
      _
    // Predicated region
    $region10: #{qnetwork_forward.1} parent=1 // pred_check
      _
    $region11: #{qnetwork_forward.1} parent=1 // pred_check_branch
      %21 = sbr.rel (0) target = $region13
    $region12: #{qnetwork_forward.1} parent=1 // pred_region
      _
    $region13: #{qnetwork_forward.1} parent=1 // pred_fallthru
      _
    // Predicated region
    $region14: #{qnetwork_forward.1} parent=1 // pred_check
      _
    $region15: #{qnetwork_forward.1} parent=1 // pred_check_branch
      %23 = sbr.rel (0) target = $region17
    $region16: #{qnetwork_forward.1} parent=1 // pred_region
      _
    $region17: #{qnetwork_forward.1} parent=1 // pred_fallthru
      _
    // Predicated region
    $region18: #{qnetwork_forward.1} parent=1 // pred_check
      _
    $region19: #{qnetwork_forward.1} parent=1 // pred_check_branch
      %25 = sbr.rel (0) target = $region21
    $region20: #{qnetwork_forward.1} parent=1 // pred_region
      _
    $region21: #{qnetwork_forward.1} parent=1 // pred_fallthru
      _
    // Predicated region
    $region22: #{qnetwork_forward.1} parent=1 // pred_check
      _
    $region23: #{qnetwork_forward.1} parent=1 // pred_check_branch
      %27 = sbr.rel (0) target = $region25
    $region24: #{qnetwork_forward.1} parent=1 // pred_region
      %s29 = ssub.s32 2048, 2048
      %30 = vsyncadd [#allocation3], %s29
      %s31 = sshll.u32 [#allocation2], 4
      %s32 = int_to_ptr.vmem [resolvable:$true] %s31
      %37 = dma.hbm_to_vmem [thread:$0]  %s5, 2048, %s32, [#allocation3], 64, 64, 4
    $region25: #{qnetwork_forward.1} parent=1 // pred_fallthru
      _
    // Predicated region
    $region26: #{qnetwork_forward.1} parent=1 // pred_check
      _
    $region27: #{qnetwork_forward.1} parent=1 // pred_check_branch
      %39 = sbr.rel (0) target = $region29
    $region28: #{qnetwork_forward.1} parent=1 // pred_region
      _
    $region29: #{qnetwork_forward.1} parent=1 // pred_fallthru
      _
    // Predicated region
    $region30: #{qnetwork_forward.1} parent=1 // pred_check
      _
    $region31: #{qnetwork_forward.1} parent=1 // pred_check_branch
      %41 = sbr.rel (0) target = $region33
    $region32: #{qnetwork_forward.1} parent=1 // pred_region
      %s43 = ssub.s32 1024, 1024
      %44 = vsyncadd [#allocation5], %s43
      %s45 = sshll.u32 [#allocation4], 4
      %s46 = int_to_ptr.vmem [resolvable:$true] %s45
      %51 = dma.hbm_to_vmem [thread:$0]  %s7, 1024, %s46, [#allocation5], 64, 64, 4
    $region33: #{qnetwork_forward.1} parent=1 // pred_fallthru
      _
    // Predicated region
    $region34: #{qnetwork_forward.1} parent=1 // pred_check
      _
    $region35: #{qnetwork_forward.1} parent=1 // pred_check_branch
      %53 = sbr.rel (0) target = $region37
    $region36: #{qnetwork_forward.1} parent=1 // pred_region
      _
    $region37: #{qnetwork_forward.1} parent=1 // pred_fallthru
      _
    // Predicated region
    $region38: #{qnetwork_forward.1} parent=1 // pred_check
      _
    $region39: #{qnetwork_forward.1} parent=1 // pred_check_branch
      %55 = sbr.rel (0) target = $region41
    $region40: #{qnetwork_forward.1} parent=1 // pred_region
      %56 = dma.done [#allocation3], 2048
    $region41: #{qnetwork_forward.1} parent=1 // pred_fallthru
      _
    // Predicated region
    $region42: #{qnetwork_forward.1} parent=1 // pred_check
      _
    $region43: #{qnetwork_forward.1} parent=1 // pred_check_branch
      %58 = sbr.rel (0) target = $region45
    $region44: #{qnetwork_forward.1} parent=1 // pred_region
      %59 = dma.done [#allocation5], 1024
    $region45: #{qnetwork_forward.1} parent=1 // pred_fallthru
      _
    %v61 = vld [vmem:[%s0] sm:$0xf]
    %v62 = vld [vmem:[%s0 + $0x4] sm:$0xf]
    %v63 = vld [vmem:[%s0 + $0x8] sm:$0xf]
    %v64 = vld [vmem:[%s0 + $0xc] sm:$0xf]
    %v65 = vld [vmem:[%s0 + $0x10] sm:$0xf]
    %v66 = vld [vmem:[%s0 + $0x14] sm:$0xf]
    %v67 = vld [vmem:[%s0 + $0x18] sm:$0xf]
    %v68 = vld [vmem:[%s0 + $0x1c] sm:$0xf]
    %v69 = vld [vmem:[%s0 + $0x20] sm:$0xf]
    %v70 = vld [vmem:[%s0 + $0x24] sm:$0xf]
    %v71 = vld [vmem:[%s0 + $0x28] sm:$0xf]
    %v72 = vld [vmem:[%s0 + $0x2c] sm:$0xf]
    %v73 = vld [vmem:[%s0 + $0x30] sm:$0xf]
    %v74 = vld [vmem:[%s0 + $0x34] sm:$0xf]
    %v75 = vld [vmem:[%s0 + $0x38] sm:$0xf]
    %v76 = vld [vmem:[%s0 + $0x3c] sm:$0xf]
    %v77 = vld [vmem:[%s0 + $0x40] sm:$0xf]
    %v78 = vld [vmem:[%s0 + $0x44] sm:$0xf]
    %v79 = vld [vmem:[%s0 + $0x48] sm:$0xf]
    %v80 = vld [vmem:[%s0 + $0x4c] sm:$0xf]
    %v81 = vld [vmem:[%s0 + $0x50] sm:$0xf]
    %v82 = vld [vmem:[%s0 + $0x54] sm:$0xf]
    %v83 = vld [vmem:[%s0 + $0x58] sm:$0xf]
    %v84 = vld [vmem:[%s0 + $0x5c] sm:$0xf]
    %v85 = vld [vmem:[%s0 + $0x60] sm:$0xf]
    %v86 = vld [vmem:[%s0 + $0x64] sm:$0xf]
    %v87 = vld [vmem:[%s0 + $0x68] sm:$0xf]
    %v88 = vld [vmem:[%s0 + $0x6c] sm:$0xf]
    %v89 = vld [vmem:[%s0 + $0x70] sm:$0xf]
    %v90 = vld [vmem:[%s0 + $0x74] sm:$0xf]
    %v91 = vld [vmem:[%s0 + $0x78] sm:$0xf]
    %v92 = vld [vmem:[%s0 + $0x7c] sm:$0xf]
    %v93 = vld [vmem:[%s0 + $0x80] sm:$0xf]
    %v94 = vld [vmem:[%s0 + $0x84] sm:$0xf]
    %v95 = vld [vmem:[%s0 + $0x88] sm:$0xf]
    %v96 = vld [vmem:[%s0 + $0x8c] sm:$0xf]
    %v97 = vld [vmem:[%s0 + $0x90] sm:$0xf]
    %v98 = vld [vmem:[%s0 + $0x94] sm:$0xf]
    %v99 = vld [vmem:[%s0 + $0x98] sm:$0xf]
    %v100 = vld [vmem:[%s0 + $0x9c] sm:$0xf]
    %v101 = vld [vmem:[%s0 + $0xa0] sm:$0xf]
    %v102 = vld [vmem:[%s0 + $0xa4] sm:$0xf]
    %v103 = vld [vmem:[%s0 + $0xa8] sm:$0xf]
    %v104 = vld [vmem:[%s0 + $0xac] sm:$0xf]
    %v105 = vld [vmem:[%s0 + $0xb0] sm:$0xf]
    %v106 = vld [vmem:[%s0 + $0xb4] sm:$0xf]
    %v107 = vld [vmem:[%s0 + $0xb8] sm:$0xf]
    %v108 = vld [vmem:[%s0 + $0xbc] sm:$0xf]
    %v109 = vld [vmem:[%s0 + $0xc0] sm:$0xf]
    %v110 = vld [vmem:[%s0 + $0xc4] sm:$0xf]
    %v111 = vld [vmem:[%s0 + $0xc8] sm:$0xf]
    %v112 = vld [vmem:[%s0 + $0xcc] sm:$0xf]
    %v113 = vld [vmem:[%s0 + $0xd0] sm:$0xf]
    %v114 = vld [vmem:[%s0 + $0xd4] sm:$0xf]
    %v115 = vld [vmem:[%s0 + $0xd8] sm:$0xf]
    %v116 = vld [vmem:[%s0 + $0xdc] sm:$0xf]
    %v117 = vld [vmem:[%s0 + $0xe0] sm:$0xf]
    %v118 = vld [vmem:[%s0 + $0xe4] sm:$0xf]
    %v119 = vld [vmem:[%s0 + $0xe8] sm:$0xf]
    %v120 = vld [vmem:[%s0 + $0xec] sm:$0xf]
    %v121 = vld [vmem:[%s0 + $0xf0] sm:$0xf]
    %v122 = vld [vmem:[%s0 + $0xf4] sm:$0xf]
    %v123 = vld [vmem:[%s0 + $0xf8] sm:$0xf]
    %v124 = vld [vmem:[%s0 + $0xfc] sm:$0xf]
    %v125 = vld [vmem:[%s1] sm:$0xf]
    %v126 = vld [vmem:[%s2] sm:$0x3]
    %v128 = vlaneseq
    %v129 = vshrl.u32 %v128, 7
    %v130 = vsub.s32 0, %v129
    %v131 = vrot.slane %v126, %v130
    %v132 = vlaneseq
    %v133 = vshrl.u32 %v132, 7
    %v134 = vsub.s32 1, %v133
    %v135 = vrot.slane %v126, %v134
    %v202 = vunpack.c.l.b16 %v61
    %v203 = vunpack.c.l.b16 %v62
    %v204 = vunpack.c.l.b16 %v63
    %v205 = vunpack.c.l.b16 %v64
    %v206 = vunpack.c.l.b16 %v65
    %v207 = vunpack.c.l.b16 %v66
    %v208 = vunpack.c.l.b16 %v67
    %v209 = vunpack.c.l.b16 %v68
    %v210 = vunpack.c.l.b16 %v69
    %v211 = vunpack.c.l.b16 %v70
    %v212 = vunpack.c.l.b16 %v71
    %v213 = vunpack.c.l.b16 %v72
    %v214 = vunpack.c.l.b16 %v73
    %v215 = vunpack.c.l.b16 %v74
    %v216 = vunpack.c.l.b16 %v75
    %v217 = vunpack.c.l.b16 %v76
    %v218 = vunpack.c.l.b16 %v77
    %v219 = vunpack.c.l.b16 %v78
    %v220 = vunpack.c.l.b16 %v79
    %v221 = vunpack.c.l.b16 %v80
    %v222 = vunpack.c.l.b16 %v81
    %v223 = vunpack.c.l.b16 %v82
    %v224 = vunpack.c.l.b16 %v83
    %v225 = vunpack.c.l.b16 %v84
    %v226 = vunpack.c.l.b16 %v85
    %v227 = vunpack.c.l.b16 %v86
    %v228 = vunpack.c.l.b16 %v87
    %v229 = vunpack.c.l.b16 %v88
    %v230 = vunpack.c.l.b16 %v89
    %v231 = vunpack.c.l.b16 %v90
    %v232 = vunpack.c.l.b16 %v91
    %v233 = vunpack.c.l.b16 %v92
    %v234 = vunpack.c.l.b16 %v93
    %v235 = vunpack.c.l.b16 %v94
    %v236 = vunpack.c.l.b16 %v95
    %v237 = vunpack.c.l.b16 %v96
    %v238 = vunpack.c.l.b16 %v97
    %v239 = vunpack.c.l.b16 %v98
    %v240 = vunpack.c.l.b16 %v99
    %v241 = vunpack.c.l.b16 %v100
    %v242 = vunpack.c.l.b16 %v101
    %v243 = vunpack.c.l.b16 %v102
    %v244 = vunpack.c.l.b16 %v103
    %v245 = vunpack.c.l.b16 %v104
    %v246 = vunpack.c.l.b16 %v105
    %v247 = vunpack.c.l.b16 %v106
    %v248 = vunpack.c.l.b16 %v107
    %v249 = vunpack.c.l.b16 %v108
    %v250 = vunpack.c.l.b16 %v109
    %v251 = vunpack.c.l.b16 %v110
    %v252 = vunpack.c.l.b16 %v111
    %v253 = vunpack.c.l.b16 %v112
    %v254 = vunpack.c.l.b16 %v113
    %v255 = vunpack.c.l.b16 %v114
    %v256 = vunpack.c.l.b16 %v115
    %v257 = vunpack.c.l.b16 %v116
    %v258 = vunpack.c.l.b16 %v117
    %v259 = vunpack.c.l.b16 %v118
    %v260 = vunpack.c.l.b16 %v119
    %v261 = vunpack.c.l.b16 %v120
    %v262 = vunpack.c.l.b16 %v121
    %v263 = vunpack.c.l.b16 %v122
    %v264 = vunpack.c.l.b16 %v123
    %v265 = vunpack.c.l.b16 %v124
    %v266 = vpack.c.b16 %v203, %v202
    %v267 = vpack.c.b16 %v205, %v204
    %v268 = vpack.c.b16 %v207, %v206
    %v269 = vpack.c.b16 %v209, %v208
    %v270 = vpack.c.b16 %v211, %v210
    %v271 = vpack.c.b16 %v213, %v212
    %v272 = vpack.c.b16 %v215, %v214
    %v273 = vpack.c.b16 %v217, %v216
    %v274 = vpack.c.b16 %v219, %v218
    %v275 = vpack.c.b16 %v221, %v220
    %v276 = vpack.c.b16 %v223, %v222
    %v277 = vpack.c.b16 %v225, %v224
    %v278 = vpack.c.b16 %v227, %v226
    %v279 = vpack.c.b16 %v229, %v228
    %v280 = vpack.c.b16 %v231, %v230
    %v281 = vpack.c.b16 %v233, %v232
    %v282 = vpack.c.b16 %v235, %v234
    %v283 = vpack.c.b16 %v237, %v236
    %v284 = vpack.c.b16 %v239, %v238
    %v285 = vpack.c.b16 %v241, %v240
    %v286 = vpack.c.b16 %v243, %v242
    %v287 = vpack.c.b16 %v245, %v244
    %v288 = vpack.c.b16 %v247, %v246
    %v289 = vpack.c.b16 %v249, %v248
    %v290 = vpack.c.b16 %v251, %v250
    %v291 = vpack.c.b16 %v253, %v252
    %v292 = vpack.c.b16 %v255, %v254
    %v293 = vpack.c.b16 %v257, %v256
    %v294 = vpack.c.b16 %v259, %v258
    %v295 = vpack.c.b16 %v261, %v260
    %v296 = vpack.c.b16 %v263, %v262
    %v297 = vpack.c.b16 %v265, %v264
    %v300 = vunpack.c.l.s4 1983009808
    %v301 = vunpack.c.0.s8 %v300
    %v302 = vlaneseq
    %v303 = vshrl.u32 %v302, 7
    %v304 = vsub.s32 %v301, %v303
    %v305 = vrot.slane %v125, %v304
    %v306 = vcombine.high %v305, %v305
    %vm307 = vcmask 31744
    %v309 = vsel %vm307, %v266, 0
    %v312 = vsel %vm307, %v267, 0
    %v315 = vsel %vm307, %v268, 0
    %v318 = vsel %vm307, %v269, 0
    %v321 = vsel %vm307, %v270, 0
    %v324 = vsel %vm307, %v271, 0
    %v327 = vsel %vm307, %v272, 0
    %v330 = vsel %vm307, %v273, 0
    %v333 = vsel %vm307, %v274, 0
    %v336 = vsel %vm307, %v275, 0
    %v339 = vsel %vm307, %v276, 0
    %v342 = vsel %vm307, %v277, 0
    %v345 = vsel %vm307, %v278, 0
    %v348 = vsel %vm307, %v279, 0
    %v351 = vsel %vm307, %v280, 0
    %v354 = vsel %vm307, %v281, 0
    %v357 = vsel %vm307, %v282, 0
    %v360 = vsel %vm307, %v283, 0
    %v363 = vsel %vm307, %v284, 0
    %v366 = vsel %vm307, %v285, 0
    %v369 = vsel %vm307, %v286, 0
    %v372 = vsel %vm307, %v287, 0
    %v375 = vsel %vm307, %v288, 0
    %v378 = vsel %vm307, %v289, 0
    %v381 = vsel %vm307, %v290, 0
    %v384 = vsel %vm307, %v291, 0
    %v387 = vsel %vm307, %v292, 0
    %v390 = vsel %vm307, %v293, 0
    %v393 = vsel %vm307, %v294, 0
    %v396 = vsel %vm307, %v295, 0
    %v399 = vsel %vm307, %v296, 0
    %v402 = vsel %vm307, %v297, 0
    %vm404 = vcmask 1041408
    %v406 = vsel %vm404, %v305, 0
    %v409 = vsel %vm404, %v306, 0
    %411 = vmatprep.subr.bf16.mxu0 %v409
    %412 = vmatpush1.bf16.msra.mxu0 %v406
    %413 = vmatprep.subr.bf16.mxu0 0
    %414 = vmatpush1.bf16.msra.mxu0 0
    %415 = vmatprep.subr.bf16.mxu0 0
    %416 = vmatpush1.bf16.msra.mxu0 0
    %417 = vmatprep.subr.bf16.mxu0 0
    %418 = vmatpush1.bf16.msra.mxu0 0
    %419 = vmatprep.subr.bf16.mxu0 0
    %420 = vmatpush1.bf16.msra.mxu0 0
    %421 = vmatprep.subr.bf16.mxu0 0
    %422 = vmatpush1.bf16.msra.mxu0 0
    %423 = vmatprep.subr.bf16.mxu0 0
    %424 = vmatpush1.bf16.msra.mxu0 0
    %425 = vmatprep.subr.bf16.mxu0 0
    %426 = vmatpush1.bf16.msra.mxu0 0
    %427 = vmatprep.subr.bf16.mxu0 0
    %428 = vmatpush1.bf16.msra.mxu0 0
    %429 = vmatprep.subr.bf16.mxu0 0
    %430 = vmatpush1.bf16.msra.mxu0 0
    %431 = vmatprep.subr.bf16.mxu0 0
    %432 = vmatpush1.bf16.msra.mxu0 0
    %433 = vmatprep.subr.bf16.mxu0 0
    %434 = vmatpush1.bf16.msra.mxu0 0
    %435 = vmatprep.subr.bf16.mxu0 0
    %436 = vmatpush1.bf16.msra.mxu0 0
    %437 = vmatprep.subr.bf16.mxu0 0
    %438 = vmatpush1.bf16.msra.mxu0 0
    %439 = vmatprep.subr.bf16.mxu0 0
    %440 = vmatpush1.bf16.msra.mxu0 0
    %441 = vmatprep.subr.bf16.mxu0 0
    %442 = vmatpush1.bf16.msra.mxu0 0
    %443 = vmatprep.mubr.bf16.mxu0 0
    %444 = vmatmul.mubr.bf16.gmra.mrb[0].mxu0 %v309
    %v445 = vpop.f32.mrb[0].mxu0
    %v446 = vadd.f32 %v131, %v445
    %v447 = vpop.f32.mrb[0].mxu0
    %v448 = vadd.f32 %v135, %v447
    %v449 = vpop.f32.mrb[0].mxu0
    %v450 = vadd.f32 %v131, %v449
    %v451 = vpop.f32.mrb[0].mxu0
    %v452 = vadd.f32 %v135, %v451
    %453 = vmatprep.mubr.bf16.mxu0 0
    %454 = vmatmul.mubr.bf16.gmra.mrb[0].mxu0 %v312
    %v455 = vpop.f32.mrb[0].mxu0
    %v456 = vadd.f32 %v131, %v455
    %v457 = vpop.f32.mrb[0].mxu0
    %v458 = vadd.f32 %v135, %v457
    %v459 = vpop.f32.mrb[0].mxu0
    %v460 = vadd.f32 %v131, %v459
    %v461 = vpop.f32.mrb[0].mxu0
    %v462 = vadd.f32 %v135, %v461
    %463 = vmatprep.mubr.bf16.mxu0 0
    %464 = vmatmul.mubr.bf16.gmra.mrb[0].mxu0 %v315
    %v465 = vpop.f32.mrb[0].mxu0
    %v466 = vadd.f32 %v131, %v465
    %v467 = vpop.f32.mrb[0].mxu0
    %v468 = vadd.f32 %v135, %v467
    %v469 = vpop.f32.mrb[0].mxu0
    %v470 = vadd.f32 %v131, %v469
    %v471 = vpop.f32.mrb[0].mxu0
    %v472 = vadd.f32 %v135, %v471
    %473 = vmatprep.mubr.bf16.mxu0 0
    %474 = vmatmul.mubr.bf16.gmra.mrb[0].mxu0 %v318
    %v475 = vpop.f32.mrb[0].mxu0
    %v476 = vadd.f32 %v131, %v475
    %v477 = vpop.f32.mrb[0].mxu0
    %v478 = vadd.f32 %v135, %v477
    %v479 = vpop.f32.mrb[0].mxu0
    %v480 = vadd.f32 %v131, %v479
    %v481 = vpop.f32.mrb[0].mxu0
    %v482 = vadd.f32 %v135, %v481
    %483 = vmatprep.mubr.bf16.mxu0 0
    %484 = vmatmul.mubr.bf16.gmra.mrb[0].mxu0 %v321
    %v485 = vpop.f32.mrb[0].mxu0
    %v486 = vadd.f32 %v131, %v485
    %v487 = vpop.f32.mrb[0].mxu0
    %v488 = vadd.f32 %v135, %v487
    %v489 = vpop.f32.mrb[0].mxu0
    %v490 = vadd.f32 %v131, %v489
    %v491 = vpop.f32.mrb[0].mxu0
    %v492 = vadd.f32 %v135, %v491
    %493 = vmatprep.mubr.bf16.mxu0 0
    %494 = vmatmul.mubr.bf16.gmra.mrb[0].mxu0 %v324
    %v495 = vpop.f32.mrb[0].mxu0
    %v496 = vadd.f32 %v131, %v495
    %v497 = vpop.f32.mrb[0].mxu0
    %v498 = vadd.f32 %v135, %v497
    %v499 = vpop.f32.mrb[0].mxu0
    %v500 = vadd.f32 %v131, %v499
    %v501 = vpop.f32.mrb[0].mxu0
    %v502 = vadd.f32 %v135, %v501
    %503 = vmatprep.mubr.bf16.mxu0 0
    %504 = vmatmul.mubr.bf16.gmra.mrb[0].mxu0 %v327
    %v505 = vpop.f32.mrb[0].mxu0
    %v506 = vadd.f32 %v131, %v505
    %v507 = vpop.f32.mrb[0].mxu0
    %v508 = vadd.f32 %v135, %v507
    %v509 = vpop.f32.mrb[0].mxu0
    %v510 = vadd.f32 %v131, %v509
    %v511 = vpop.f32.mrb[0].mxu0
    %v512 = vadd.f32 %v135, %v511
    %513 = vmatprep.mubr.bf16.mxu0 0
    %514 = vmatmul.mubr.bf16.gmra.mrb[0].mxu0 %v330
    %v515 = vpop.f32.mrb[0].mxu0
    %v516 = vadd.f32 %v131, %v515
    %v517 = vpop.f32.mrb[0].mxu0
    %v518 = vadd.f32 %v135, %v517
    %v519 = vpop.f32.mrb[0].mxu0
    %v520 = vadd.f32 %v131, %v519
    %v521 = vpop.f32.mrb[0].mxu0
    %v522 = vadd.f32 %v135, %v521
    %523 = vmatprep.mubr.bf16.mxu0 0
    %524 = vmatmul.mubr.bf16.gmra.mrb[0].mxu0 %v333
    %v525 = vpop.f32.mrb[0].mxu0
    %v526 = vadd.f32 %v131, %v525
    %v527 = vpop.f32.mrb[0].mxu0
    %v528 = vadd.f32 %v135, %v527
    %v529 = vpop.f32.mrb[0].mxu0
    %v530 = vadd.f32 %v131, %v529
    %v531 = vpop.f32.mrb[0].mxu0
    %v532 = vadd.f32 %v135, %v531
    %533 = vmatprep.mubr.bf16.mxu0 0
    %534 = vmatmul.mubr.bf16.gmra.mrb[0].mxu0 %v336
    %v535 = vpop.f32.mrb[0].mxu0
    %v536 = vadd.f32 %v131, %v535
    %v537 = vpop.f32.mrb[0].mxu0
    %v538 = vadd.f32 %v135, %v537
    %v539 = vpop.f32.mrb[0].mxu0
    %v540 = vadd.f32 %v131, %v539
    %v541 = vpop.f32.mrb[0].mxu0
    %v542 = vadd.f32 %v135, %v541
    %543 = vmatprep.mubr.bf16.mxu0 0
    %544 = vmatmul.mubr.bf16.gmra.mrb[0].mxu0 %v339
    %v545 = vpop.f32.mrb[0].mxu0
    %v546 = vadd.f32 %v131, %v545
    %v547 = vpop.f32.mrb[0].mxu0
    %v548 = vadd.f32 %v135, %v547
    %v549 = vpop.f32.mrb[0].mxu0
    %v550 = vadd.f32 %v131, %v549
    %v551 = vpop.f32.mrb[0].mxu0
    %v552 = vadd.f32 %v135, %v551
    %553 = vmatprep.mubr.bf16.mxu0 0
    %554 = vmatmul.mubr.bf16.gmra.mrb[0].mxu0 %v342
    %v555 = vpop.f32.mrb[0].mxu0
    %v556 = vadd.f32 %v131, %v555
    %v557 = vpop.f32.mrb[0].mxu0
    %v558 = vadd.f32 %v135, %v557
    %v559 = vpop.f32.mrb[0].mxu0
    %v560 = vadd.f32 %v131, %v559
    %v561 = vpop.f32.mrb[0].mxu0
    %v562 = vadd.f32 %v135, %v561
    %563 = vmatprep.mubr.bf16.mxu0 0
    %564 = vmatmul.mubr.bf16.gmra.mrb[0].mxu0 %v345
    %v565 = vpop.f32.mrb[0].mxu0
    %v566 = vadd.f32 %v131, %v565
    %v567 = vpop.f32.mrb[0].mxu0
    %v568 = vadd.f32 %v135, %v567
    %v569 = vpop.f32.mrb[0].mxu0
    %v570 = vadd.f32 %v131, %v569
    %v571 = vpop.f32.mrb[0].mxu0
    %v572 = vadd.f32 %v135, %v571
    %573 = vmatprep.mubr.bf16.mxu0 0
    %574 = vmatmul.mubr.bf16.gmra.mrb[0].mxu0 %v348
    %v575 = vpop.f32.mrb[0].mxu0
    %v576 = vadd.f32 %v131, %v575
    %v577 = vpop.f32.mrb[0].mxu0
    %v578 = vadd.f32 %v135, %v577
    %v579 = vpop.f32.mrb[0].mxu0
    %v580 = vadd.f32 %v131, %v579
    %v581 = vpop.f32.mrb[0].mxu0
    %v582 = vadd.f32 %v135, %v581
    %583 = vmatprep.mubr.bf16.mxu0 0
    %584 = vmatmul.mubr.bf16.gmra.mrb[0].mxu0 %v351
    %v585 = vpop.f32.mrb[0].mxu0
    %v586 = vadd.f32 %v131, %v585
    %v587 = vpop.f32.mrb[0].mxu0
    %v588 = vadd.f32 %v135, %v587
    %v589 = vpop.f32.mrb[0].mxu0
    %v590 = vadd.f32 %v131, %v589
    %v591 = vpop.f32.mrb[0].mxu0
    %v592 = vadd.f32 %v135, %v591
    %593 = vmatprep.mubr.bf16.mxu0 0
    %594 = vmatmul.mubr.bf16.gmra.mrb[0].mxu0 %v354
    %v595 = vpop.f32.mrb[0].mxu0
    %v596 = vadd.f32 %v131, %v595
    %v597 = vpop.f32.mrb[0].mxu0
    %v598 = vadd.f32 %v135, %v597
    %v599 = vpop.f32.mrb[0].mxu0
    %v600 = vadd.f32 %v131, %v599
    %v601 = vpop.f32.mrb[0].mxu0
    %v602 = vadd.f32 %v135, %v601
    %603 = vmatprep.mubr.bf16.mxu0 0
    %604 = vmatmul.mubr.bf16.gmra.mrb[0].mxu0 %v357
    %v605 = vpop.f32.mrb[0].mxu0
    %v606 = vadd.f32 %v131, %v605
    %v607 = vpop.f32.mrb[0].mxu0
    %v608 = vadd.f32 %v135, %v607
    %v609 = vpop.f32.mrb[0].mxu0
    %v610 = vadd.f32 %v131, %v609
    %v611 = vpop.f32.mrb[0].mxu0
    %v612 = vadd.f32 %v135, %v611
    %613 = vmatprep.mubr.bf16.mxu0 0
    %614 = vmatmul.mubr.bf16.gmra.mrb[0].mxu0 %v360
    %v615 = vpop.f32.mrb[0].mxu0
    %v616 = vadd.f32 %v131, %v615
    %v617 = vpop.f32.mrb[0].mxu0
    %v618 = vadd.f32 %v135, %v617
    %v619 = vpop.f32.mrb[0].mxu0
    %v620 = vadd.f32 %v131, %v619
    %v621 = vpop.f32.mrb[0].mxu0
    %v622 = vadd.f32 %v135, %v621
    %623 = vmatprep.mubr.bf16.mxu0 0
    %624 = vmatmul.mubr.bf16.gmra.mrb[0].mxu0 %v363
    %v625 = vpop.f32.mrb[0].mxu0
    %v626 = vadd.f32 %v131, %v625
    %v627 = vpop.f32.mrb[0].mxu0
    %v628 = vadd.f32 %v135, %v627
    %v629 = vpop.f32.mrb[0].mxu0
    %v630 = vadd.f32 %v131, %v629
    %v631 = vpop.f32.mrb[0].mxu0
    %v632 = vadd.f32 %v135, %v631
    %633 = vmatprep.mubr.bf16.mxu0 0
    %634 = vmatmul.mubr.bf16.gmra.mrb[0].mxu0 %v366
    %v635 = vpop.f32.mrb[0].mxu0
    %v636 = vadd.f32 %v131, %v635
    %v637 = vpop.f32.mrb[0].mxu0
    %v638 = vadd.f32 %v135, %v637
    %v639 = vpop.f32.mrb[0].mxu0
    %v640 = vadd.f32 %v131, %v639
    %v641 = vpop.f32.mrb[0].mxu0
    %v642 = vadd.f32 %v135, %v641
    %643 = vmatprep.mubr.bf16.mxu0 0
    %644 = vmatmul.mubr.bf16.gmra.mrb[0].mxu0 %v369
    %v645 = vpop.f32.mrb[0].mxu0
    %v646 = vadd.f32 %v131, %v645
    %v647 = vpop.f32.mrb[0].mxu0
    %v648 = vadd.f32 %v135, %v647
    %v649 = vpop.f32.mrb[0].mxu0
    %v650 = vadd.f32 %v131, %v649
    %v651 = vpop.f32.mrb[0].mxu0
    %v652 = vadd.f32 %v135, %v651
    %653 = vmatprep.mubr.bf16.mxu0 0
    %654 = vmatmul.mubr.bf16.gmra.mrb[0].mxu0 %v372
    %v655 = vpop.f32.mrb[0].mxu0
    %v656 = vadd.f32 %v131, %v655
    %v657 = vpop.f32.mrb[0].mxu0
    %v658 = vadd.f32 %v135, %v657
    %v659 = vpop.f32.mrb[0].mxu0
    %v660 = vadd.f32 %v131, %v659
    %v661 = vpop.f32.mrb[0].mxu0
    %v662 = vadd.f32 %v135, %v661
    %663 = vmatprep.mubr.bf16.mxu0 0
    %664 = vmatmul.mubr.bf16.gmra.mrb[0].mxu0 %v375
    %v665 = vpop.f32.mrb[0].mxu0
    %v666 = vadd.f32 %v131, %v665
    %v667 = vpop.f32.mrb[0].mxu0
    %v668 = vadd.f32 %v135, %v667
    %v669 = vpop.f32.mrb[0].mxu0
    %v670 = vadd.f32 %v131, %v669
    %v671 = vpop.f32.mrb[0].mxu0
    %v672 = vadd.f32 %v135, %v671
    %673 = vmatprep.mubr.bf16.mxu0 0
    %674 = vmatmul.mubr.bf16.gmra.mrb[0].mxu0 %v378
    %v675 = vpop.f32.mrb[0].mxu0
    %v676 = vadd.f32 %v131, %v675
    %v677 = vpop.f32.mrb[0].mxu0
    %v678 = vadd.f32 %v135, %v677
    %v679 = vpop.f32.mrb[0].mxu0
    %v680 = vadd.f32 %v131, %v679
    %v681 = vpop.f32.mrb[0].mxu0
    %v682 = vadd.f32 %v135, %v681
    %683 = vmatprep.mubr.bf16.mxu0 0
    %684 = vmatmul.mubr.bf16.gmra.mrb[0].mxu0 %v381
    %v685 = vpop.f32.mrb[0].mxu0
    %v686 = vadd.f32 %v131, %v685
    %v687 = vpop.f32.mrb[0].mxu0
    %v688 = vadd.f32 %v135, %v687
    %v689 = vpop.f32.mrb[0].mxu0
    %v690 = vadd.f32 %v131, %v689
    %v691 = vpop.f32.mrb[0].mxu0
    %v692 = vadd.f32 %v135, %v691
    %693 = vmatprep.mubr.bf16.mxu0 0
    %694 = vmatmul.mubr.bf16.gmra.mrb[0].mxu0 %v384
    %v695 = vpop.f32.mrb[0].mxu0
    %v696 = vadd.f32 %v131, %v695
    %v697 = vpop.f32.mrb[0].mxu0
    %v698 = vadd.f32 %v135, %v697
    %v699 = vpop.f32.mrb[0].mxu0
    %v700 = vadd.f32 %v131, %v699
    %v701 = vpop.f32.mrb[0].mxu0
    %v702 = vadd.f32 %v135, %v701
    %703 = vmatprep.mubr.bf16.mxu0 0
    %704 = vmatmul.mubr.bf16.gmra.mrb[0].mxu0 %v387
    %v705 = vpop.f32.mrb[0].mxu0
    %v706 = vadd.f32 %v131, %v705
    %v707 = vpop.f32.mrb[0].mxu0
    %v708 = vadd.f32 %v135, %v707
    %v709 = vpop.f32.mrb[0].mxu0
    %v710 = vadd.f32 %v131, %v709
    %v711 = vpop.f32.mrb[0].mxu0
    %v712 = vadd.f32 %v135, %v711
    %713 = vmatprep.mubr.bf16.mxu0 0
    %714 = vmatmul.mubr.bf16.gmra.mrb[0].mxu0 %v390
    %v715 = vpop.f32.mrb[0].mxu0
    %v716 = vadd.f32 %v131, %v715
    %v717 = vpop.f32.mrb[0].mxu0
    %v718 = vadd.f32 %v135, %v717
    %v719 = vpop.f32.mrb[0].mxu0
    %v720 = vadd.f32 %v131, %v719
    %v721 = vpop.f32.mrb[0].mxu0
    %v722 = vadd.f32 %v135, %v721
    %723 = vmatprep.mubr.bf16.mxu0 0
    %724 = vmatmul.mubr.bf16.gmra.mrb[0].mxu0 %v393
    %v725 = vpop.f32.mrb[0].mxu0
    %v726 = vadd.f32 %v131, %v725
    %v727 = vpop.f32.mrb[0].mxu0
    %v728 = vadd.f32 %v135, %v727
    %v729 = vpop.f32.mrb[0].mxu0
    %v730 = vadd.f32 %v131, %v729
    %v731 = vpop.f32.mrb[0].mxu0
    %v732 = vadd.f32 %v135, %v731
    %733 = vmatprep.mubr.bf16.mxu0 0
    %734 = vmatmul.mubr.bf16.gmra.mrb[0].mxu0 %v396
    %v735 = vpop.f32.mrb[0].mxu0
    %v736 = vadd.f32 %v131, %v735
    %v737 = vpop.f32.mrb[0].mxu0
    %v738 = vadd.f32 %v135, %v737
    %v739 = vpop.f32.mrb[0].mxu0
    %v740 = vadd.f32 %v131, %v739
    %v741 = vpop.f32.mrb[0].mxu0
    %v742 = vadd.f32 %v135, %v741
    %743 = vmatprep.mubr.bf16.mxu0 0
    %744 = vmatmul.mubr.bf16.gmra.mrb[0].mxu0 %v399
    %v745 = vpop.f32.mrb[0].mxu0
    %v746 = vadd.f32 %v131, %v745
    %v747 = vpop.f32.mrb[0].mxu0
    %v748 = vadd.f32 %v135, %v747
    %v749 = vpop.f32.mrb[0].mxu0
    %v750 = vadd.f32 %v131, %v749
    %v751 = vpop.f32.mrb[0].mxu0
    %v752 = vadd.f32 %v135, %v751
    %753 = vmatprep.mubr.bf16.mxu0 0
    %754 = vmatmul.mubr.bf16.gmra.mrb[0].mxu0 %v402
    %v755 = vpop.f32.mrb[0].mxu0
    %v756 = vadd.f32 %v131, %v755
    %v757 = vpop.f32.mrb[0].mxu0
    %v758 = vadd.f32 %v135, %v757
    %v759 = vpop.f32.mrb[0].mxu0
    %v760 = vadd.f32 %v131, %v759
    %v761 = vpop.f32.mrb[0].mxu0
    %v762 = vadd.f32 %v135, %v761
    %763 = vdwg.mxu0
    %v764 = vmax.f32 %v446, 0.0
    %v765 = vmax.f32 %v448, 0.0
    %v766 = vmax.f32 %v450, 0.0
    %v767 = vmax.f32 %v452, 0.0
    %v768 = vmax.f32 %v456, 0.0
    %v769 = vmax.f32 %v458, 0.0
    %v770 = vmax.f32 %v460, 0.0
    %v771 = vmax.f32 %v462, 0.0
    %v772 = vmax.f32 %v466, 0.0
    %v773 = vmax.f32 %v468, 0.0
    %v774 = vmax.f32 %v470, 0.0
    %v775 = vmax.f32 %v472, 0.0
    %v776 = vmax.f32 %v476, 0.0
    %v777 = vmax.f32 %v478, 0.0
    %v778 = vmax.f32 %v480, 0.0
    %v779 = vmax.f32 %v482, 0.0
    %v780 = vmax.f32 %v486, 0.0
    %v781 = vmax.f32 %v488, 0.0
    %v782 = vmax.f32 %v490, 0.0
    %v783 = vmax.f32 %v492, 0.0
    %v784 = vmax.f32 %v496, 0.0
    %v785 = vmax.f32 %v498, 0.0
    %v786 = vmax.f32 %v500, 0.0
    %v787 = vmax.f32 %v502, 0.0
    %v788 = vmax.f32 %v506, 0.0
    %v789 = vmax.f32 %v508, 0.0
    %v790 = vmax.f32 %v510, 0.0
    %v791 = vmax.f32 %v512, 0.0
    %v792 = vmax.f32 %v516, 0.0
    %v793 = vmax.f32 %v518, 0.0
    %v794 = vmax.f32 %v520, 0.0
    %v795 = vmax.f32 %v522, 0.0
    %v796 = vmax.f32 %v526, 0.0
    %v797 = vmax.f32 %v528, 0.0
    %v798 = vmax.f32 %v530, 0.0
    %v799 = vmax.f32 %v532, 0.0
    %v800 = vmax.f32 %v536, 0.0
    %v801 = vmax.f32 %v538, 0.0
    %v802 = vmax.f32 %v540, 0.0
    %v803 = vmax.f32 %v542, 0.0
    %v804 = vmax.f32 %v546, 0.0
    %v805 = vmax.f32 %v548, 0.0
    %v806 = vmax.f32 %v550, 0.0
    %v807 = vmax.f32 %v552, 0.0
    %v808 = vmax.f32 %v556, 0.0
    %v809 = vmax.f32 %v558, 0.0
    %v810 = vmax.f32 %v560, 0.0
    %v811 = vmax.f32 %v562, 0.0
    %v812 = vmax.f32 %v566, 0.0
    %v813 = vmax.f32 %v568, 0.0
    %v814 = vmax.f32 %v570, 0.0
    %v815 = vmax.f32 %v572, 0.0
    %v816 = vmax.f32 %v576, 0.0
    %v817 = vmax.f32 %v578, 0.0
    %v818 = vmax.f32 %v580, 0.0
    %v819 = vmax.f32 %v582, 0.0
    %v820 = vmax.f32 %v586, 0.0
    %v821 = vmax.f32 %v588, 0.0
    %v822 = vmax.f32 %v590, 0.0
    %v823 = vmax.f32 %v592, 0.0
    %v824 = vmax.f32 %v596, 0.0
    %v825 = vmax.f32 %v598, 0.0
    %v826 = vmax.f32 %v600, 0.0
    %v827 = vmax.f32 %v602, 0.0
    %v828 = vmax.f32 %v606, 0.0
    %v829 = vmax.f32 %v608, 0.0
    %v830 = vmax.f32 %v610, 0.0
    %v831 = vmax.f32 %v612, 0.0
    %v832 = vmax.f32 %v616, 0.0
    %v833 = vmax.f32 %v618, 0.0
    %v834 = vmax.f32 %v620, 0.0
    %v835 = vmax.f32 %v622, 0.0
    %v836 = vmax.f32 %v626, 0.0
    %v837 = vmax.f32 %v628, 0.0
    %v838 = vmax.f32 %v630, 0.0
    %v839 = vmax.f32 %v632, 0.0
    %v840 = vmax.f32 %v636, 0.0
    %v841 = vmax.f32 %v638, 0.0
    %v842 = vmax.f32 %v640, 0.0
    %v843 = vmax.f32 %v642, 0.0
    %v844 = vmax.f32 %v646, 0.0
    %v845 = vmax.f32 %v648, 0.0
    %v846 = vmax.f32 %v650, 0.0
    %v847 = vmax.f32 %v652, 0.0
    %v848 = vmax.f32 %v656, 0.0
    %v849 = vmax.f32 %v658, 0.0
    %v850 = vmax.f32 %v660, 0.0
    %v851 = vmax.f32 %v662, 0.0
    %v852 = vmax.f32 %v666, 0.0
    %v853 = vmax.f32 %v668, 0.0
    %v854 = vmax.f32 %v670, 0.0
    %v855 = vmax.f32 %v672, 0.0
    %v856 = vmax.f32 %v676, 0.0
    %v857 = vmax.f32 %v678, 0.0
    %v858 = vmax.f32 %v680, 0.0
    %v859 = vmax.f32 %v682, 0.0
    %v860 = vmax.f32 %v686, 0.0
    %v861 = vmax.f32 %v688, 0.0
    %v862 = vmax.f32 %v690, 0.0
    %v863 = vmax.f32 %v692, 0.0
    %v864 = vmax.f32 %v696, 0.0
    %v865 = vmax.f32 %v698, 0.0
    %v866 = vmax.f32 %v700, 0.0
    %v867 = vmax.f32 %v702, 0.0
    %v868 = vmax.f32 %v706, 0.0
    %v869 = vmax.f32 %v708, 0.0
    %v870 = vmax.f32 %v710, 0.0
    %v871 = vmax.f32 %v712, 0.0
    %v872 = vmax.f32 %v716, 0.0
    %v873 = vmax.f32 %v718, 0.0
    %v874 = vmax.f32 %v720, 0.0
    %v875 = vmax.f32 %v722, 0.0
    %v876 = vmax.f32 %v726, 0.0
    %v877 = vmax.f32 %v728, 0.0
    %v878 = vmax.f32 %v730, 0.0
    %v879 = vmax.f32 %v732, 0.0
    %v880 = vmax.f32 %v736, 0.0
    %v881 = vmax.f32 %v738, 0.0
    %v882 = vmax.f32 %v740, 0.0
    %v883 = vmax.f32 %v742, 0.0
    %v884 = vmax.f32 %v746, 0.0
    %v885 = vmax.f32 %v748, 0.0
    %v886 = vmax.f32 %v750, 0.0
    %v887 = vmax.f32 %v752, 0.0
    %v888 = vmax.f32 %v756, 0.0
    %v889 = vmax.f32 %v758, 0.0
    %v890 = vmax.f32 %v760, 0.0
    %v891 = vmax.f32 %v762, 0.0
    %v892 = vpack.c.bf16 %v766, %v764
    %v893 = vpack.c.bf16 %v767, %v765
    %v894 = vpack.c.bf16 %v770, %v768
    %v895 = vpack.c.bf16 %v771, %v769
    %v896 = vpack.c.bf16 %v774, %v772
    %v897 = vpack.c.bf16 %v775, %v773
    %v898 = vpack.c.bf16 %v778, %v776
    %v899 = vpack.c.bf16 %v779, %v777
    %v900 = vpack.c.bf16 %v782, %v780
    %v901 = vpack.c.bf16 %v783, %v781
    %v902 = vpack.c.bf16 %v786, %v784
    %v903 = vpack.c.bf16 %v787, %v785
    %v904 = vpack.c.bf16 %v790, %v788
    %v905 = vpack.c.bf16 %v791, %v789
    %v906 = vpack.c.bf16 %v794, %v792
    %v907 = vpack.c.bf16 %v795, %v793
    %v908 = vpack.c.bf16 %v798, %v796
    %v909 = vpack.c.bf16 %v799, %v797
    %v910 = vpack.c.bf16 %v802, %v800
    %v911 = vpack.c.bf16 %v803, %v801
    %v912 = vpack.c.bf16 %v806, %v804
    %v913 = vpack.c.bf16 %v807, %v805
    %v914 = vpack.c.bf16 %v810, %v808
    %v915 = vpack.c.bf16 %v811, %v809
    %v916 = vpack.c.bf16 %v814, %v812
    %v917 = vpack.c.bf16 %v815, %v813
    %v918 = vpack.c.bf16 %v818, %v816
    %v919 = vpack.c.bf16 %v819, %v817
    %v920 = vpack.c.bf16 %v822, %v820
    %v921 = vpack.c.bf16 %v823, %v821
    %v922 = vpack.c.bf16 %v826, %v824
    %v923 = vpack.c.bf16 %v827, %v825
    %v924 = vpack.c.bf16 %v830, %v828
    %v925 = vpack.c.bf16 %v831, %v829
    %v926 = vpack.c.bf16 %v834, %v832
    %v927 = vpack.c.bf16 %v835, %v833
    %v928 = vpack.c.bf16 %v838, %v836
    %v929 = vpack.c.bf16 %v839, %v837
    %v930 = vpack.c.bf16 %v842, %v840
    %v931 = vpack.c.bf16 %v843, %v841
    %v932 = vpack.c.bf16 %v846, %v844
    %v933 = vpack.c.bf16 %v847, %v845
    %v934 = vpack.c.bf16 %v850, %v848
    %v935 = vpack.c.bf16 %v851, %v849
    %v936 = vpack.c.bf16 %v854, %v852
    %v937 = vpack.c.bf16 %v855, %v853
    %v938 = vpack.c.bf16 %v858, %v856
    %v939 = vpack.c.bf16 %v859, %v857
    %v940 = vpack.c.bf16 %v862, %v860
    %v941 = vpack.c.bf16 %v863, %v861
    %v942 = vpack.c.bf16 %v866, %v864
    %v943 = vpack.c.bf16 %v867, %v865
    %v944 = vpack.c.bf16 %v870, %v868
    %v945 = vpack.c.bf16 %v871, %v869
    %v946 = vpack.c.bf16 %v874, %v872
    %v947 = vpack.c.bf16 %v875, %v873
    %v948 = vpack.c.bf16 %v878, %v876
    %v949 = vpack.c.bf16 %v879, %v877
    %v950 = vpack.c.bf16 %v882, %v880
    %v951 = vpack.c.bf16 %v883, %v881
    %v952 = vpack.c.bf16 %v886, %v884
    %v953 = vpack.c.bf16 %v887, %v885
    %v954 = vpack.c.bf16 %v890, %v888
    %v955 = vpack.c.bf16 %v891, %v889
    %v956 = vld [vmem:[%s3] sm:$0xff]
    %v957 = vld [vmem:[%s3 + $0x8] sm:$0xff]
    %v958 = vld [vmem:[%s3 + $0x10] sm:$0xff]
    %v959 = vld [vmem:[%s3 + $0x18] sm:$0xff]
    %v960 = vld [vmem:[%s3 + $0x20] sm:$0xff]
    %v961 = vld [vmem:[%s3 + $0x28] sm:$0xff]
    %v962 = vld [vmem:[%s3 + $0x30] sm:$0xff]
    %v963 = vld [vmem:[%s3 + $0x38] sm:$0xff]
    %v964 = vld [vmem:[%s3 + $0x40] sm:$0xff]
    %v965 = vld [vmem:[%s3 + $0x48] sm:$0xff]
    %v966 = vld [vmem:[%s3 + $0x50] sm:$0xff]
    %v967 = vld [vmem:[%s3 + $0x58] sm:$0xff]
    %v968 = vld [vmem:[%s3 + $0x60] sm:$0xff]
    %v969 = vld [vmem:[%s3 + $0x68] sm:$0xff]
    %v970 = vld [vmem:[%s3 + $0x70] sm:$0xff]
    %v971 = vld [vmem:[%s3 + $0x78] sm:$0xff]
    %v972 = vld [vmem:[%s3 + $0x80] sm:$0xff]
    %v973 = vld [vmem:[%s3 + $0x88] sm:$0xff]
    %v974 = vld [vmem:[%s3 + $0x90] sm:$0xff]
    %v975 = vld [vmem:[%s3 + $0x98] sm:$0xff]
    %v976 = vld [vmem:[%s3 + $0xa0] sm:$0xff]
    %v977 = vld [vmem:[%s3 + $0xa8] sm:$0xff]
    %v978 = vld [vmem:[%s3 + $0xb0] sm:$0xff]
    %v979 = vld [vmem:[%s3 + $0xb8] sm:$0xff]
    %v980 = vld [vmem:[%s3 + $0xc0] sm:$0xff]
    %v981 = vld [vmem:[%s3 + $0xc8] sm:$0xff]
    %v982 = vld [vmem:[%s3 + $0xd0] sm:$0xff]
    %v983 = vld [vmem:[%s3 + $0xd8] sm:$0xff]
    %v984 = vld [vmem:[%s3 + $0xe0] sm:$0xff]
    %v985 = vld [vmem:[%s3 + $0xe8] sm:$0xff]
    %v986 = vld [vmem:[%s3 + $0xf0] sm:$0xff]
    %v987 = vld [vmem:[%s3 + $0xf8] sm:$0xff]
    %v988 = vld [vmem:[%s4] sm:$0x3]
    %v990 = vlaneseq
    %v991 = vshrl.u32 %v990, 7
    %v992 = vsub.s32 0, %v991
    %v993 = vrot.slane %v988, %v992
    %v994 = vlaneseq
    %v995 = vshrl.u32 %v994, 7
    %v996 = vsub.s32 1, %v995
    %v997 = vrot.slane %v988, %v996
    %v1032 = vunpack.c.l.b16 %v956
    %v1033 = vunpack.c.h.b16 %v956
    %v1034 = vunpack.c.l.b16 %v957
    %v1035 = vunpack.c.h.b16 %v957
    %v1036 = vunpack.c.l.b16 %v958
    %v1037 = vunpack.c.h.b16 %v958
    %v1038 = vunpack.c.l.b16 %v959
    %v1039 = vunpack.c.h.b16 %v959
    %v1040 = vunpack.c.l.b16 %v960
    %v1041 = vunpack.c.h.b16 %v960
    %v1042 = vunpack.c.l.b16 %v961
    %v1043 = vunpack.c.h.b16 %v961
    %v1044 = vunpack.c.l.b16 %v962
    %v1045 = vunpack.c.h.b16 %v962
    %v1046 = vunpack.c.l.b16 %v963
    %v1047 = vunpack.c.h.b16 %v963
    %v1048 = vunpack.c.l.b16 %v964
    %v1049 = vunpack.c.h.b16 %v964
    %v1050 = vunpack.c.l.b16 %v965
    %v1051 = vunpack.c.h.b16 %v965
    %v1052 = vunpack.c.l.b16 %v966
    %v1053 = vunpack.c.h.b16 %v966
    %v1054 = vunpack.c.l.b16 %v967
    %v1055 = vunpack.c.h.b16 %v967
    %v1056 = vunpack.c.l.b16 %v968
    %v1057 = vunpack.c.h.b16 %v968
    %v1058 = vunpack.c.l.b16 %v969
    %v1059 = vunpack.c.h.b16 %v969
    %v1060 = vunpack.c.l.b16 %v970
    %v1061 = vunpack.c.h.b16 %v970
    %v1062 = vunpack.c.l.b16 %v971
    %v1063 = vunpack.c.h.b16 %v971
    %v1064 = vunpack.c.l.b16 %v972
    %v1065 = vunpack.c.h.b16 %v972
    %v1066 = vunpack.c.l.b16 %v973
    %v1067 = vunpack.c.h.b16 %v973
    %v1068 = vunpack.c.l.b16 %v974
    %v1069 = vunpack.c.h.b16 %v974
    %v1070 = vunpack.c.l.b16 %v975
    %v1071 = vunpack.c.h.b16 %v975
    %v1072 = vunpack.c.l.b16 %v976
    %v1073 = vunpack.c.h.b16 %v976
    %v1074 = vunpack.c.l.b16 %v977
    %v1075 = vunpack.c.h.b16 %v977
    %v1076 = vunpack.c.l.b16 %v978
    %v1077 = vunpack.c.h.b16 %v978
    %v1078 = vunpack.c.l.b16 %v979
    %v1079 = vunpack.c.h.b16 %v979
    %v1080 = vunpack.c.l.b16 %v980
    %v1081 = vunpack.c.h.b16 %v980
    %v1082 = vunpack.c.l.b16 %v981
    %v1083 = vunpack.c.h.b16 %v981
    %v1084 = vunpack.c.l.b16 %v982
    %v1085 = vunpack.c.h.b16 %v982
    %v1086 = vunpack.c.l.b16 %v983
    %v1087 = vunpack.c.h.b16 %v983
    %v1088 = vunpack.c.l.b16 %v984
    %v1089 = vunpack.c.h.b16 %v984
    %v1090 = vunpack.c.l.b16 %v985
    %v1091 = vunpack.c.h.b16 %v985
    %v1092 = vunpack.c.l.b16 %v986
    %v1093 = vunpack.c.h.b16 %v986
    %v1094 = vunpack.c.l.b16 %v987
    %v1095 = vunpack.c.h.b16 %v987
    %v1096 = vpack.c.b16 %v1034, %v1032
    %v1097 = vpack.c.b16 %v1035, %v1033
    %v1098 = vpack.c.b16 %v1038, %v1036
    %v1099 = vpack.c.b16 %v1039, %v1037
    %v1100 = vpack.c.b16 %v1042, %v1040
    %v1101 = vpack.c.b16 %v1043, %v1041
    %v1102 = vpack.c.b16 %v1046, %v1044
    %v1103 = vpack.c.b16 %v1047, %v1045
    %v1104 = vpack.c.b16 %v1050, %v1048
    %v1105 = vpack.c.b16 %v1051, %v1049
    %v1106 = vpack.c.b16 %v1054, %v1052
    %v1107 = vpack.c.b16 %v1055, %v1053
    %v1108 = vpack.c.b16 %v1058, %v1056
    %v1109 = vpack.c.b16 %v1059, %v1057
    %v1110 = vpack.c.b16 %v1062, %v1060
    %v1111 = vpack.c.b16 %v1063, %v1061
    %v1112 = vpack.c.b16 %v1066, %v1064
    %v1113 = vpack.c.b16 %v1067, %v1065
    %v1114 = vpack.c.b16 %v1070, %v1068
    %v1115 = vpack.c.b16 %v1071, %v1069
    %v1116 = vpack.c.b16 %v1074, %v1072
    %v1117 = vpack.c.b16 %v1075, %v1073
    %v1118 = vpack.c.b16 %v1078, %v1076
    %v1119 = vpack.c.b16 %v1079, %v1077
    %v1120 = vpack.c.b16 %v1082, %v1080
    %v1121 = vpack.c.b16 %v1083, %v1081
    %v1122 = vpack.c.b16 %v1086, %v1084
    %v1123 = vpack.c.b16 %v1087, %v1085
    %v1124 = vpack.c.b16 %v1090, %v1088
    %v1125 = vpack.c.b16 %v1091, %v1089
    %v1126 = vpack.c.b16 %v1094, %v1092
    %v1127 = vpack.c.b16 %v1095, %v1093
    %1160 = vmatprep.subr.bf16.mxu0 %v1097
    %1161 = vmatpush1.bf16.msra.mxu0 %v1096
    %1162 = vmatprep.subr.bf16.mxu0 %v1099
    %1163 = vmatpush1.bf16.msra.mxu0 %v1098
    %1164 = vmatprep.subr.bf16.mxu0 %v1101
    %1165 = vmatpush1.bf16.msra.mxu0 %v1100
    %1166 = vmatprep.subr.bf16.mxu0 %v1103
    %1167 = vmatpush1.bf16.msra.mxu0 %v1102
    %1168 = vmatprep.subr.bf16.mxu0 %v1105
    %1169 = vmatpush1.bf16.msra.mxu0 %v1104
    %1170 = vmatprep.subr.bf16.mxu0 %v1107
    %1171 = vmatpush1.bf16.msra.mxu0 %v1106
    %1172 = vmatprep.subr.bf16.mxu0 %v1109
    %1173 = vmatpush1.bf16.msra.mxu0 %v1108
    %1174 = vmatprep.subr.bf16.mxu0 %v1111
    %1175 = vmatpush1.bf16.msra.mxu0 %v1110
    %1176 = vmatprep.subr.bf16.mxu0 %v1113
    %1177 = vmatpush1.bf16.msra.mxu0 %v1112
    %1178 = vmatprep.subr.bf16.mxu0 %v1115
    %1179 = vmatpush1.bf16.msra.mxu0 %v1114
    %1180 = vmatprep.subr.bf16.mxu0 %v1117
    %1181 = vmatpush1.bf16.msra.mxu0 %v1116
    %1182 = vmatprep.subr.bf16.mxu0 %v1119
    %1183 = vmatpush1.bf16.msra.mxu0 %v1118
    %1184 = vmatprep.subr.bf16.mxu0 %v1121
    %1185 = vmatpush1.bf16.msra.mxu0 %v1120
    %1186 = vmatprep.subr.bf16.mxu0 %v1123
    %1187 = vmatpush1.bf16.msra.mxu0 %v1122
    %1188 = vmatprep.subr.bf16.mxu0 %v1125
    %1189 = vmatpush1.bf16.msra.mxu0 %v1124
    %1190 = vmatprep.subr.bf16.mxu0 %v1127
    %1191 = vmatpush1.bf16.msra.mxu0 %v1126
    %1192 = vmatprep.mubr.bf16.mxu0 %v893
    %1193 = vmatmul.mubr.bf16.gmra.mrb[0].mxu0 %v892
    %v1194 = vpop.f32.mrb[0].mxu0
    %v1195 = vadd.f32 %v993, %v1194
    %v1196 = vpop.f32.mrb[0].mxu0
    %v1197 = vadd.f32 %v997, %v1196
    %v1198 = vpop.f32.mrb[0].mxu0
    %v1199 = vadd.f32 %v993, %v1198
    %v1200 = vpop.f32.mrb[0].mxu0
    %v1201 = vadd.f32 %v997, %v1200
    %1202 = vmatprep.mubr.bf16.mxu0 %v895
    %1203 = vmatmul.mubr.bf16.gmra.mrb[0].mxu0 %v894
    %v1204 = vpop.f32.mrb[0].mxu0
    %v1205 = vadd.f32 %v993, %v1204
    %v1206 = vpop.f32.mrb[0].mxu0
    %v1207 = vadd.f32 %v997, %v1206
    %v1208 = vpop.f32.mrb[0].mxu0
    %v1209 = vadd.f32 %v993, %v1208
    %v1210 = vpop.f32.mrb[0].mxu0
    %v1211 = vadd.f32 %v997, %v1210
    %1212 = vmatprep.mubr.bf16.mxu0 %v897
    %1213 = vmatmul.mubr.bf16.gmra.mrb[0].mxu0 %v896
    %v1214 = vpop.f32.mrb[0].mxu0
    %v1215 = vadd.f32 %v993, %v1214
    %v1216 = vpop.f32.mrb[0].mxu0
    %v1217 = vadd.f32 %v997, %v1216
    %v1218 = vpop.f32.mrb[0].mxu0
    %v1219 = vadd.f32 %v993, %v1218
    %v1220 = vpop.f32.mrb[0].mxu0
    %v1221 = vadd.f32 %v997, %v1220
    %1222 = vmatprep.mubr.bf16.mxu0 %v899
    %1223 = vmatmul.mubr.bf16.gmra.mrb[0].mxu0 %v898
    %v1224 = vpop.f32.mrb[0].mxu0
    %v1225 = vadd.f32 %v993, %v1224
    %v1226 = vpop.f32.mrb[0].mxu0
    %v1227 = vadd.f32 %v997, %v1226
    %v1228 = vpop.f32.mrb[0].mxu0
    %v1229 = vadd.f32 %v993, %v1228
    %v1230 = vpop.f32.mrb[0].mxu0
    %v1231 = vadd.f32 %v997, %v1230
    %1232 = vmatprep.mubr.bf16.mxu0 %v901
    %1233 = vmatmul.mubr.bf16.gmra.mrb[0].mxu0 %v900
    %v1234 = vpop.f32.mrb[0].mxu0
    %v1235 = vadd.f32 %v993, %v1234
    %v1236 = vpop.f32.mrb[0].mxu0
    %v1237 = vadd.f32 %v997, %v1236
    %v1238 = vpop.f32.mrb[0].mxu0
    %v1239 = vadd.f32 %v993, %v1238
    %v1240 = vpop.f32.mrb[0].mxu0
    %v1241 = vadd.f32 %v997, %v1240
    %1242 = vmatprep.mubr.bf16.mxu0 %v903
    %1243 = vmatmul.mubr.bf16.gmra.mrb[0].mxu0 %v902
    %v1244 = vpop.f32.mrb[0].mxu0
    %v1245 = vadd.f32 %v993, %v1244
    %v1246 = vpop.f32.mrb[0].mxu0
    %v1247 = vadd.f32 %v997, %v1246
    %v1248 = vpop.f32.mrb[0].mxu0
    %v1249 = vadd.f32 %v993, %v1248
    %v1250 = vpop.f32.mrb[0].mxu0
    %v1251 = vadd.f32 %v997, %v1250
    %1252 = vmatprep.mubr.bf16.mxu0 %v905
    %1253 = vmatmul.mubr.bf16.gmra.mrb[0].mxu0 %v904
    %v1254 = vpop.f32.mrb[0].mxu0
    %v1255 = vadd.f32 %v993, %v1254
    %v1256 = vpop.f32.mrb[0].mxu0
    %v1257 = vadd.f32 %v997, %v1256
    %v1258 = vpop.f32.mrb[0].mxu0
    %v1259 = vadd.f32 %v993, %v1258
    %v1260 = vpop.f32.mrb[0].mxu0
    %v1261 = vadd.f32 %v997, %v1260
    %1262 = vmatprep.mubr.bf16.mxu0 %v907
    %1263 = vmatmul.mubr.bf16.gmra.mrb[0].mxu0 %v906
    %v1264 = vpop.f32.mrb[0].mxu0
    %v1265 = vadd.f32 %v993, %v1264
    %v1266 = vpop.f32.mrb[0].mxu0
    %v1267 = vadd.f32 %v997, %v1266
    %v1268 = vpop.f32.mrb[0].mxu0
    %v1269 = vadd.f32 %v993, %v1268
    %v1270 = vpop.f32.mrb[0].mxu0
    %v1271 = vadd.f32 %v997, %v1270
    %1272 = vmatprep.mubr.bf16.mxu0 %v909
    %1273 = vmatmul.mubr.bf16.gmra.mrb[0].mxu0 %v908
    %v1274 = vpop.f32.mrb[0].mxu0
    %v1275 = vadd.f32 %v993, %v1274
    %v1276 = vpop.f32.mrb[0].mxu0
    %v1277 = vadd.f32 %v997, %v1276
    %v1278 = vpop.f32.mrb[0].mxu0
    %v1279 = vadd.f32 %v993, %v1278
    %v1280 = vpop.f32.mrb[0].mxu0
    %v1281 = vadd.f32 %v997, %v1280
    %1282 = vmatprep.mubr.bf16.mxu0 %v911
    %1283 = vmatmul.mubr.bf16.gmra.mrb[0].mxu0 %v910
    %v1284 = vpop.f32.mrb[0].mxu0
    %v1285 = vadd.f32 %v993, %v1284
    %v1286 = vpop.f32.mrb[0].mxu0
    %v1287 = vadd.f32 %v997, %v1286
    %v1288 = vpop.f32.mrb[0].mxu0
    %v1289 = vadd.f32 %v993, %v1288
    %v1290 = vpop.f32.mrb[0].mxu0
    %v1291 = vadd.f32 %v997, %v1290
    %1292 = vmatprep.mubr.bf16.mxu0 %v913
    %1293 = vmatmul.mubr.bf16.gmra.mrb[0].mxu0 %v912
    %v1294 = vpop.f32.mrb[0].mxu0
    %v1295 = vadd.f32 %v993, %v1294
    %v1296 = vpop.f32.mrb[0].mxu0
    %v1297 = vadd.f32 %v997, %v1296
    %v1298 = vpop.f32.mrb[0].mxu0
    %v1299 = vadd.f32 %v993, %v1298
    %v1300 = vpop.f32.mrb[0].mxu0
    %v1301 = vadd.f32 %v997, %v1300
    %1302 = vmatprep.mubr.bf16.mxu0 %v915
    %1303 = vmatmul.mubr.bf16.gmra.mrb[0].mxu0 %v914
    %v1304 = vpop.f32.mrb[0].mxu0
    %v1305 = vadd.f32 %v993, %v1304
    %v1306 = vpop.f32.mrb[0].mxu0
    %v1307 = vadd.f32 %v997, %v1306
    %v1308 = vpop.f32.mrb[0].mxu0
    %v1309 = vadd.f32 %v993, %v1308
    %v1310 = vpop.f32.mrb[0].mxu0
    %v1311 = vadd.f32 %v997, %v1310
    %1312 = vmatprep.mubr.bf16.mxu0 %v917
    %1313 = vmatmul.mubr.bf16.gmra.mrb[0].mxu0 %v916
    %v1314 = vpop.f32.mrb[0].mxu0
    %v1315 = vadd.f32 %v993, %v1314
    %v1316 = vpop.f32.mrb[0].mxu0
    %v1317 = vadd.f32 %v997, %v1316
    %v1318 = vpop.f32.mrb[0].mxu0
    %v1319 = vadd.f32 %v993, %v1318
    %v1320 = vpop.f32.mrb[0].mxu0
    %v1321 = vadd.f32 %v997, %v1320
    %1322 = vmatprep.mubr.bf16.mxu0 %v919
    %1323 = vmatmul.mubr.bf16.gmra.mrb[0].mxu0 %v918
    %v1324 = vpop.f32.mrb[0].mxu0
    %v1325 = vadd.f32 %v993, %v1324
    %v1326 = vpop.f32.mrb[0].mxu0
    %v1327 = vadd.f32 %v997, %v1326
    %v1328 = vpop.f32.mrb[0].mxu0
    %v1329 = vadd.f32 %v993, %v1328
    %v1330 = vpop.f32.mrb[0].mxu0
    %v1331 = vadd.f32 %v997, %v1330
    %1332 = vmatprep.mubr.bf16.mxu0 %v921
    %1333 = vmatmul.mubr.bf16.gmra.mrb[0].mxu0 %v920
    %v1334 = vpop.f32.mrb[0].mxu0
    %v1335 = vadd.f32 %v993, %v1334
    %v1336 = vpop.f32.mrb[0].mxu0
    %v1337 = vadd.f32 %v997, %v1336
    %v1338 = vpop.f32.mrb[0].mxu0
    %v1339 = vadd.f32 %v993, %v1338
    %v1340 = vpop.f32.mrb[0].mxu0
    %v1341 = vadd.f32 %v997, %v1340
    %1342 = vmatprep.mubr.bf16.mxu0 %v923
    %1343 = vmatmul.mubr.bf16.gmra.mrb[0].mxu0 %v922
    %v1344 = vpop.f32.mrb[0].mxu0
    %v1345 = vadd.f32 %v993, %v1344
    %v1346 = vpop.f32.mrb[0].mxu0
    %v1347 = vadd.f32 %v997, %v1346
    %v1348 = vpop.f32.mrb[0].mxu0
    %v1349 = vadd.f32 %v993, %v1348
    %v1350 = vpop.f32.mrb[0].mxu0
    %v1351 = vadd.f32 %v997, %v1350
    %1352 = vmatprep.mubr.bf16.mxu0 %v925
    %1353 = vmatmul.mubr.bf16.gmra.mrb[0].mxu0 %v924
    %v1354 = vpop.f32.mrb[0].mxu0
    %v1355 = vadd.f32 %v993, %v1354
    %v1356 = vpop.f32.mrb[0].mxu0
    %v1357 = vadd.f32 %v997, %v1356
    %v1358 = vpop.f32.mrb[0].mxu0
    %v1359 = vadd.f32 %v993, %v1358
    %v1360 = vpop.f32.mrb[0].mxu0
    %v1361 = vadd.f32 %v997, %v1360
    %1362 = vmatprep.mubr.bf16.mxu0 %v927
    %1363 = vmatmul.mubr.bf16.gmra.mrb[0].mxu0 %v926
    %v1364 = vpop.f32.mrb[0].mxu0
    %v1365 = vadd.f32 %v993, %v1364
    %v1366 = vpop.f32.mrb[0].mxu0
    %v1367 = vadd.f32 %v997, %v1366
    %v1368 = vpop.f32.mrb[0].mxu0
    %v1369 = vadd.f32 %v993, %v1368
    %v1370 = vpop.f32.mrb[0].mxu0
    %v1371 = vadd.f32 %v997, %v1370
    %1372 = vmatprep.mubr.bf16.mxu0 %v929
    %1373 = vmatmul.mubr.bf16.gmra.mrb[0].mxu0 %v928
    %v1374 = vpop.f32.mrb[0].mxu0
    %v1375 = vadd.f32 %v993, %v1374
    %v1376 = vpop.f32.mrb[0].mxu0
    %v1377 = vadd.f32 %v997, %v1376
    %v1378 = vpop.f32.mrb[0].mxu0
    %v1379 = vadd.f32 %v993, %v1378
    %v1380 = vpop.f32.mrb[0].mxu0
    %v1381 = vadd.f32 %v997, %v1380
    %1382 = vmatprep.mubr.bf16.mxu0 %v931
    %1383 = vmatmul.mubr.bf16.gmra.mrb[0].mxu0 %v930
    %v1384 = vpop.f32.mrb[0].mxu0
    %v1385 = vadd.f32 %v993, %v1384
    %v1386 = vpop.f32.mrb[0].mxu0
    %v1387 = vadd.f32 %v997, %v1386
    %v1388 = vpop.f32.mrb[0].mxu0
    %v1389 = vadd.f32 %v993, %v1388
    %v1390 = vpop.f32.mrb[0].mxu0
    %v1391 = vadd.f32 %v997, %v1390
    %1392 = vmatprep.mubr.bf16.mxu0 %v933
    %1393 = vmatmul.mubr.bf16.gmra.mrb[0].mxu0 %v932
    %v1394 = vpop.f32.mrb[0].mxu0
    %v1395 = vadd.f32 %v993, %v1394
    %v1396 = vpop.f32.mrb[0].mxu0
    %v1397 = vadd.f32 %v997, %v1396
    %v1398 = vpop.f32.mrb[0].mxu0
    %v1399 = vadd.f32 %v993, %v1398
    %v1400 = vpop.f32.mrb[0].mxu0
    %v1401 = vadd.f32 %v997, %v1400
    %1402 = vmatprep.mubr.bf16.mxu0 %v935
    %1403 = vmatmul.mubr.bf16.gmra.mrb[0].mxu0 %v934
    %v1404 = vpop.f32.mrb[0].mxu0
    %v1405 = vadd.f32 %v993, %v1404
    %v1406 = vpop.f32.mrb[0].mxu0
    %v1407 = vadd.f32 %v997, %v1406
    %v1408 = vpop.f32.mrb[0].mxu0
    %v1409 = vadd.f32 %v993, %v1408
    %v1410 = vpop.f32.mrb[0].mxu0
    %v1411 = vadd.f32 %v997, %v1410
    %1412 = vmatprep.mubr.bf16.mxu0 %v937
    %1413 = vmatmul.mubr.bf16.gmra.mrb[0].mxu0 %v936
    %v1414 = vpop.f32.mrb[0].mxu0
    %v1415 = vadd.f32 %v993, %v1414
    %v1416 = vpop.f32.mrb[0].mxu0
    %v1417 = vadd.f32 %v997, %v1416
    %v1418 = vpop.f32.mrb[0].mxu0
    %v1419 = vadd.f32 %v993, %v1418
    %v1420 = vpop.f32.mrb[0].mxu0
    %v1421 = vadd.f32 %v997, %v1420
    %1422 = vmatprep.mubr.bf16.mxu0 %v939
    %1423 = vmatmul.mubr.bf16.gmra.mrb[0].mxu0 %v938
    %v1424 = vpop.f32.mrb[0].mxu0
    %v1425 = vadd.f32 %v993, %v1424
    %v1426 = vpop.f32.mrb[0].mxu0
    %v1427 = vadd.f32 %v997, %v1426
    %v1428 = vpop.f32.mrb[0].mxu0
    %v1429 = vadd.f32 %v993, %v1428
    %v1430 = vpop.f32.mrb[0].mxu0
    %v1431 = vadd.f32 %v997, %v1430
    %1432 = vmatprep.mubr.bf16.mxu0 %v941
    %1433 = vmatmul.mubr.bf16.gmra.mrb[0].mxu0 %v940
    %v1434 = vpop.f32.mrb[0].mxu0
    %v1435 = vadd.f32 %v993, %v1434
    %v1436 = vpop.f32.mrb[0].mxu0
    %v1437 = vadd.f32 %v997, %v1436
    %v1438 = vpop.f32.mrb[0].mxu0
    %v1439 = vadd.f32 %v993, %v1438
    %v1440 = vpop.f32.mrb[0].mxu0
    %v1441 = vadd.f32 %v997, %v1440
    %1442 = vmatprep.mubr.bf16.mxu0 %v943
    %1443 = vmatmul.mubr.bf16.gmra.mrb[0].mxu0 %v942
    %v1444 = vpop.f32.mrb[0].mxu0
    %v1445 = vadd.f32 %v993, %v1444
    %v1446 = vpop.f32.mrb[0].mxu0
    %v1447 = vadd.f32 %v997, %v1446
    %v1448 = vpop.f32.mrb[0].mxu0
    %v1449 = vadd.f32 %v993, %v1448
    %v1450 = vpop.f32.mrb[0].mxu0
    %v1451 = vadd.f32 %v997, %v1450
    %1452 = vmatprep.mubr.bf16.mxu0 %v945
    %1453 = vmatmul.mubr.bf16.gmra.mrb[0].mxu0 %v944
    %v1454 = vpop.f32.mrb[0].mxu0
    %v1455 = vadd.f32 %v993, %v1454
    %v1456 = vpop.f32.mrb[0].mxu0
    %v1457 = vadd.f32 %v997, %v1456
    %v1458 = vpop.f32.mrb[0].mxu0
    %v1459 = vadd.f32 %v993, %v1458
    %v1460 = vpop.f32.mrb[0].mxu0
    %v1461 = vadd.f32 %v997, %v1460
    %1462 = vmatprep.mubr.bf16.mxu0 %v947
    %1463 = vmatmul.mubr.bf16.gmra.mrb[0].mxu0 %v946
    %v1464 = vpop.f32.mrb[0].mxu0
    %v1465 = vadd.f32 %v993, %v1464
    %v1466 = vpop.f32.mrb[0].mxu0
    %v1467 = vadd.f32 %v997, %v1466
    %v1468 = vpop.f32.mrb[0].mxu0
    %v1469 = vadd.f32 %v993, %v1468
    %v1470 = vpop.f32.mrb[0].mxu0
    %v1471 = vadd.f32 %v997, %v1470
    %1472 = vmatprep.mubr.bf16.mxu0 %v949
    %1473 = vmatmul.mubr.bf16.gmra.mrb[0].mxu0 %v948
    %v1474 = vpop.f32.mrb[0].mxu0
    %v1475 = vadd.f32 %v993, %v1474
    %v1476 = vpop.f32.mrb[0].mxu0
    %v1477 = vadd.f32 %v997, %v1476
    %v1478 = vpop.f32.mrb[0].mxu0
    %v1479 = vadd.f32 %v993, %v1478
    %v1480 = vpop.f32.mrb[0].mxu0
    %v1481 = vadd.f32 %v997, %v1480
    %1482 = vmatprep.mubr.bf16.mxu0 %v951
    %1483 = vmatmul.mubr.bf16.gmra.mrb[0].mxu0 %v950
    %v1484 = vpop.f32.mrb[0].mxu0
    %v1485 = vadd.f32 %v993, %v1484
    %v1486 = vpop.f32.mrb[0].mxu0
    %v1487 = vadd.f32 %v997, %v1486
    %v1488 = vpop.f32.mrb[0].mxu0
    %v1489 = vadd.f32 %v993, %v1488
    %v1490 = vpop.f32.mrb[0].mxu0
    %v1491 = vadd.f32 %v997, %v1490
    %1492 = vmatprep.mubr.bf16.mxu0 %v953
    %1493 = vmatmul.mubr.bf16.gmra.mrb[0].mxu0 %v952
    %v1494 = vpop.f32.mrb[0].mxu0
    %v1495 = vadd.f32 %v993, %v1494
    %v1496 = vpop.f32.mrb[0].mxu0
    %v1497 = vadd.f32 %v997, %v1496
    %v1498 = vpop.f32.mrb[0].mxu0
    %v1499 = vadd.f32 %v993, %v1498
    %v1500 = vpop.f32.mrb[0].mxu0
    %v1501 = vadd.f32 %v997, %v1500
    %1502 = vmatprep.mubr.bf16.mxu0 %v955
    %1503 = vmatmul.mubr.bf16.gmra.mrb[0].mxu0 %v954
    %v1504 = vpop.f32.mrb[0].mxu0
    %v1505 = vadd.f32 %v993, %v1504
    %v1506 = vpop.f32.mrb[0].mxu0
    %v1507 = vadd.f32 %v997, %v1506
    %v1508 = vpop.f32.mrb[0].mxu0
    %v1509 = vadd.f32 %v993, %v1508
    %v1510 = vpop.f32.mrb[0].mxu0
    %v1511 = vadd.f32 %v997, %v1510
    %1512 = vdwg.mxu0
    %v1513 = vmax.f32 %v1195, 0.0
    %v1514 = vmax.f32 %v1197, 0.0
    %v1515 = vmax.f32 %v1199, 0.0
    %v1516 = vmax.f32 %v1201, 0.0
    %v1517 = vmax.f32 %v1205, 0.0
    %v1518 = vmax.f32 %v1207, 0.0
    %v1519 = vmax.f32 %v1209, 0.0
    %v1520 = vmax.f32 %v1211, 0.0
    %v1521 = vmax.f32 %v1215, 0.0
    %v1522 = vmax.f32 %v1217, 0.0
    %v1523 = vmax.f32 %v1219, 0.0
    %v1524 = vmax.f32 %v1221, 0.0
    %v1525 = vmax.f32 %v1225, 0.0
    %v1526 = vmax.f32 %v1227, 0.0
    %v1527 = vmax.f32 %v1229, 0.0
    %v1528 = vmax.f32 %v1231, 0.0
    %v1529 = vmax.f32 %v1235, 0.0
    %v1530 = vmax.f32 %v1237, 0.0
    %v1531 = vmax.f32 %v1239, 0.0
    %v1532 = vmax.f32 %v1241, 0.0
    %v1533 = vmax.f32 %v1245, 0.0
    %v1534 = vmax.f32 %v1247, 0.0
    %v1535 = vmax.f32 %v1249, 0.0
    %v1536 = vmax.f32 %v1251, 0.0
    %v1537 = vmax.f32 %v1255, 0.0
    %v1538 = vmax.f32 %v1257, 0.0
    %v1539 = vmax.f32 %v1259, 0.0
    %v1540 = vmax.f32 %v1261, 0.0
    %v1541 = vmax.f32 %v1265, 0.0
    %v1542 = vmax.f32 %v1267, 0.0
    %v1543 = vmax.f32 %v1269, 0.0
    %v1544 = vmax.f32 %v1271, 0.0
    %v1545 = vmax.f32 %v1275, 0.0
    %v1546 = vmax.f32 %v1277, 0.0
    %v1547 = vmax.f32 %v1279, 0.0
    %v1548 = vmax.f32 %v1281, 0.0
    %v1549 = vmax.f32 %v1285, 0.0
    %v1550 = vmax.f32 %v1287, 0.0
    %v1551 = vmax.f32 %v1289, 0.0
    %v1552 = vmax.f32 %v1291, 0.0
    %v1553 = vmax.f32 %v1295, 0.0
    %v1554 = vmax.f32 %v1297, 0.0
    %v1555 = vmax.f32 %v1299, 0.0
    %v1556 = vmax.f32 %v1301, 0.0
    %v1557 = vmax.f32 %v1305, 0.0
    %v1558 = vmax.f32 %v1307, 0.0
    %v1559 = vmax.f32 %v1309, 0.0
    %v1560 = vmax.f32 %v1311, 0.0
    %v1561 = vmax.f32 %v1315, 0.0
    %v1562 = vmax.f32 %v1317, 0.0
    %v1563 = vmax.f32 %v1319, 0.0
    %v1564 = vmax.f32 %v1321, 0.0
    %v1565 = vmax.f32 %v1325, 0.0
    %v1566 = vmax.f32 %v1327, 0.0
    %v1567 = vmax.f32 %v1329, 0.0
    %v1568 = vmax.f32 %v1331, 0.0
    %v1569 = vmax.f32 %v1335, 0.0
    %v1570 = vmax.f32 %v1337, 0.0
    %v1571 = vmax.f32 %v1339, 0.0
    %v1572 = vmax.f32 %v1341, 0.0
    %v1573 = vmax.f32 %v1345, 0.0
    %v1574 = vmax.f32 %v1347, 0.0
    %v1575 = vmax.f32 %v1349, 0.0
    %v1576 = vmax.f32 %v1351, 0.0
    %v1577 = vmax.f32 %v1355, 0.0
    %v1578 = vmax.f32 %v1357, 0.0
    %v1579 = vmax.f32 %v1359, 0.0
    %v1580 = vmax.f32 %v1361, 0.0
    %v1581 = vmax.f32 %v1365, 0.0
    %v1582 = vmax.f32 %v1367, 0.0
    %v1583 = vmax.f32 %v1369, 0.0
    %v1584 = vmax.f32 %v1371, 0.0
    %v1585 = vmax.f32 %v1375, 0.0
    %v1586 = vmax.f32 %v1377, 0.0
    %v1587 = vmax.f32 %v1379, 0.0
    %v1588 = vmax.f32 %v1381, 0.0
    %v1589 = vmax.f32 %v1385, 0.0
    %v1590 = vmax.f32 %v1387, 0.0
    %v1591 = vmax.f32 %v1389, 0.0
    %v1592 = vmax.f32 %v1391, 0.0
    %v1593 = vmax.f32 %v1395, 0.0
    %v1594 = vmax.f32 %v1397, 0.0
    %v1595 = vmax.f32 %v1399, 0.0
    %v1596 = vmax.f32 %v1401, 0.0
    %v1597 = vmax.f32 %v1405, 0.0
    %v1598 = vmax.f32 %v1407, 0.0
    %v1599 = vmax.f32 %v1409, 0.0
    %v1600 = vmax.f32 %v1411, 0.0
    %v1601 = vmax.f32 %v1415, 0.0
    %v1602 = vmax.f32 %v1417, 0.0
    %v1603 = vmax.f32 %v1419, 0.0
    %v1604 = vmax.f32 %v1421, 0.0
    %v1605 = vmax.f32 %v1425, 0.0
    %v1606 = vmax.f32 %v1427, 0.0
    %v1607 = vmax.f32 %v1429, 0.0
    %v1608 = vmax.f32 %v1431, 0.0
    %v1609 = vmax.f32 %v1435, 0.0
    %v1610 = vmax.f32 %v1437, 0.0
    %v1611 = vmax.f32 %v1439, 0.0
    %v1612 = vmax.f32 %v1441, 0.0
    %v1613 = vmax.f32 %v1445, 0.0
    %v1614 = vmax.f32 %v1447, 0.0
    %v1615 = vmax.f32 %v1449, 0.0
    %v1616 = vmax.f32 %v1451, 0.0
    %v1617 = vmax.f32 %v1455, 0.0
    %v1618 = vmax.f32 %v1457, 0.0
    %v1619 = vmax.f32 %v1459, 0.0
    %v1620 = vmax.f32 %v1461, 0.0
    %v1621 = vmax.f32 %v1465, 0.0
    %v1622 = vmax.f32 %v1467, 0.0
    %v1623 = vmax.f32 %v1469, 0.0
    %v1624 = vmax.f32 %v1471, 0.0
    %v1625 = vmax.f32 %v1475, 0.0
    %v1626 = vmax.f32 %v1477, 0.0
    %v1627 = vmax.f32 %v1479, 0.0
    %v1628 = vmax.f32 %v1481, 0.0
    %v1629 = vmax.f32 %v1485, 0.0
    %v1630 = vmax.f32 %v1487, 0.0
    %v1631 = vmax.f32 %v1489, 0.0
    %v1632 = vmax.f32 %v1491, 0.0
    %v1633 = vmax.f32 %v1495, 0.0
    %v1634 = vmax.f32 %v1497, 0.0
    %v1635 = vmax.f32 %v1499, 0.0
    %v1636 = vmax.f32 %v1501, 0.0
    %v1637 = vmax.f32 %v1505, 0.0
    %v1638 = vmax.f32 %v1507, 0.0
    %v1639 = vmax.f32 %v1509, 0.0
    %v1640 = vmax.f32 %v1511, 0.0
    %v1641 = vpack.c.bf16 %v1515, %v1513
    %v1642 = vpack.c.bf16 %v1516, %v1514
    %v1643 = vpack.c.bf16 %v1519, %v1517
    %v1644 = vpack.c.bf16 %v1520, %v1518
    %v1645 = vpack.c.bf16 %v1523, %v1521
    %v1646 = vpack.c.bf16 %v1524, %v1522
    %v1647 = vpack.c.bf16 %v1527, %v1525
    %v1648 = vpack.c.bf16 %v1528, %v1526
    %v1649 = vpack.c.bf16 %v1531, %v1529
    %v1650 = vpack.c.bf16 %v1532, %v1530
    %v1651 = vpack.c.bf16 %v1535, %v1533
    %v1652 = vpack.c.bf16 %v1536, %v1534
    %v1653 = vpack.c.bf16 %v1539, %v1537
    %v1654 = vpack.c.bf16 %v1540, %v1538
    %v1655 = vpack.c.bf16 %v1543, %v1541
    %v1656 = vpack.c.bf16 %v1544, %v1542
    %v1657 = vpack.c.bf16 %v1547, %v1545
    %v1658 = vpack.c.bf16 %v1548, %v1546
    %v1659 = vpack.c.bf16 %v1551, %v1549
    %v1660 = vpack.c.bf16 %v1552, %v1550
    %v1661 = vpack.c.bf16 %v1555, %v1553
    %v1662 = vpack.c.bf16 %v1556, %v1554
    %v1663 = vpack.c.bf16 %v1559, %v1557
    %v1664 = vpack.c.bf16 %v1560, %v1558
    %v1665 = vpack.c.bf16 %v1563, %v1561
    %v1666 = vpack.c.bf16 %v1564, %v1562
    %v1667 = vpack.c.bf16 %v1567, %v1565
    %v1668 = vpack.c.bf16 %v1568, %v1566
    %v1669 = vpack.c.bf16 %v1571, %v1569
    %v1670 = vpack.c.bf16 %v1572, %v1570
    %v1671 = vpack.c.bf16 %v1575, %v1573
    %v1672 = vpack.c.bf16 %v1576, %v1574
    %v1673 = vpack.c.bf16 %v1579, %v1577
    %v1674 = vpack.c.bf16 %v1580, %v1578
    %v1675 = vpack.c.bf16 %v1583, %v1581
    %v1676 = vpack.c.bf16 %v1584, %v1582
    %v1677 = vpack.c.bf16 %v1587, %v1585
    %v1678 = vpack.c.bf16 %v1588, %v1586
    %v1679 = vpack.c.bf16 %v1591, %v1589
    %v1680 = vpack.c.bf16 %v1592, %v1590
    %v1681 = vpack.c.bf16 %v1595, %v1593
    %v1682 = vpack.c.bf16 %v1596, %v1594
    %v1683 = vpack.c.bf16 %v1599, %v1597
    %v1684 = vpack.c.bf16 %v1600, %v1598
    %v1685 = vpack.c.bf16 %v1603, %v1601
    %v1686 = vpack.c.bf16 %v1604, %v1602
    %v1687 = vpack.c.bf16 %v1607, %v1605
    %v1688 = vpack.c.bf16 %v1608, %v1606
    %v1689 = vpack.c.bf16 %v1611, %v1609
    %v1690 = vpack.c.bf16 %v1612, %v1610
    %v1691 = vpack.c.bf16 %v1615, %v1613
    %v1692 = vpack.c.bf16 %v1616, %v1614
    %v1693 = vpack.c.bf16 %v1619, %v1617
    %v1694 = vpack.c.bf16 %v1620, %v1618
    %v1695 = vpack.c.bf16 %v1623, %v1621
    %v1696 = vpack.c.bf16 %v1624, %v1622
    %v1697 = vpack.c.bf16 %v1627, %v1625
    %v1698 = vpack.c.bf16 %v1628, %v1626
    %v1699 = vpack.c.bf16 %v1631, %v1629
    %v1700 = vpack.c.bf16 %v1632, %v1630
    %v1701 = vpack.c.bf16 %v1635, %v1633
    %v1702 = vpack.c.bf16 %v1636, %v1634
    %v1703 = vpack.c.bf16 %v1639, %v1637
    %v1704 = vpack.c.bf16 %v1640, %v1638
    %v1705 = vld [vmem:[#allocation2] sm:$0xf]
    %v1706 = vld [vmem:[#allocation2 + $0x4] sm:$0xf]
    %v1707 = vld [vmem:[#allocation2 + $0x8] sm:$0xf]
    %v1708 = vld [vmem:[#allocation2 + $0xc] sm:$0xf]
    %v1709 = vld [vmem:[#allocation2 + $0x10] sm:$0xf]
    %v1710 = vld [vmem:[#allocation2 + $0x14] sm:$0xf]
    %v1711 = vld [vmem:[#allocation2 + $0x18] sm:$0xf]
    %v1712 = vld [vmem:[#allocation2 + $0x1c] sm:$0xf]
    %v1713 = vld [vmem:[#allocation2 + $0x20] sm:$0xf]
    %v1714 = vld [vmem:[#allocation2 + $0x24] sm:$0xf]
    %v1715 = vld [vmem:[#allocation2 + $0x28] sm:$0xf]
    %v1716 = vld [vmem:[#allocation2 + $0x2c] sm:$0xf]
    %v1717 = vld [vmem:[#allocation2 + $0x30] sm:$0xf]
    %v1718 = vld [vmem:[#allocation2 + $0x34] sm:$0xf]
    %v1719 = vld [vmem:[#allocation2 + $0x38] sm:$0xf]
    %v1720 = vld [vmem:[#allocation2 + $0x3c] sm:$0xf]
    %v1721 = vld [vmem:[#allocation2 + $0x40] sm:$0xf]
    %v1722 = vld [vmem:[#allocation2 + $0x44] sm:$0xf]
    %v1723 = vld [vmem:[#allocation2 + $0x48] sm:$0xf]
    %v1724 = vld [vmem:[#allocation2 + $0x4c] sm:$0xf]
    %v1725 = vld [vmem:[#allocation2 + $0x50] sm:$0xf]
    %v1726 = vld [vmem:[#allocation2 + $0x54] sm:$0xf]
    %v1727 = vld [vmem:[#allocation2 + $0x58] sm:$0xf]
    %v1728 = vld [vmem:[#allocation2 + $0x5c] sm:$0xf]
    %v1729 = vld [vmem:[#allocation2 + $0x60] sm:$0xf]
    %v1730 = vld [vmem:[#allocation2 + $0x64] sm:$0xf]
    %v1731 = vld [vmem:[#allocation2 + $0x68] sm:$0xf]
    %v1732 = vld [vmem:[#allocation2 + $0x6c] sm:$0xf]
    %v1733 = vld [vmem:[#allocation2 + $0x70] sm:$0xf]
    %v1734 = vld [vmem:[#allocation2 + $0x74] sm:$0xf]
    %v1735 = vld [vmem:[#allocation2 + $0x78] sm:$0xf]
    %v1736 = vld [vmem:[#allocation2 + $0x7c] sm:$0xf]
    %v1737 = vld [vmem:[%s6] sm:$0x1]
    %v1739 = vlaneseq
    %v1740 = vshrl.u32 %v1739, 7
    %v1741 = vsub.s32 0, %v1740
    %v1742 = vrot.slane %v1737, %v1741
    %v1776 = vunpack.c.l.b16 %v1705
    %v1777 = vunpack.c.l.b16 %v1706
    %v1778 = vunpack.c.l.b16 %v1707
    %v1779 = vunpack.c.l.b16 %v1708
    %v1780 = vunpack.c.l.b16 %v1709
    %v1781 = vunpack.c.l.b16 %v1710
    %v1782 = vunpack.c.l.b16 %v1711
    %v1783 = vunpack.c.l.b16 %v1712
    %v1784 = vunpack.c.l.b16 %v1713
    %v1785 = vunpack.c.l.b16 %v1714
    %v1786 = vunpack.c.l.b16 %v1715
    %v1787 = vunpack.c.l.b16 %v1716
    %v1788 = vunpack.c.l.b16 %v1717
    %v1789 = vunpack.c.l.b16 %v1718
    %v1790 = vunpack.c.l.b16 %v1719
    %v1791 = vunpack.c.l.b16 %v1720
    %v1792 = vunpack.c.l.b16 %v1721
    %v1793 = vunpack.c.l.b16 %v1722
    %v1794 = vunpack.c.l.b16 %v1723
    %v1795 = vunpack.c.l.b16 %v1724
    %v1796 = vunpack.c.l.b16 %v1725
    %v1797 = vunpack.c.l.b16 %v1726
    %v1798 = vunpack.c.l.b16 %v1727
    %v1799 = vunpack.c.l.b16 %v1728
    %v1800 = vunpack.c.l.b16 %v1729
    %v1801 = vunpack.c.l.b16 %v1730
    %v1802 = vunpack.c.l.b16 %v1731
    %v1803 = vunpack.c.l.b16 %v1732
    %v1804 = vunpack.c.l.b16 %v1733
    %v1805 = vunpack.c.l.b16 %v1734
    %v1806 = vunpack.c.l.b16 %v1735
    %v1807 = vunpack.c.l.b16 %v1736
    %v1808 = vpack.c.b16 %v1777, %v1776
    %v1809 = vpack.c.b16 %v1779, %v1778
    %v1810 = vpack.c.b16 %v1781, %v1780
    %v1811 = vpack.c.b16 %v1783, %v1782
    %v1812 = vpack.c.b16 %v1785, %v1784
    %v1813 = vpack.c.b16 %v1787, %v1786
    %v1814 = vpack.c.b16 %v1789, %v1788
    %v1815 = vpack.c.b16 %v1791, %v1790
    %v1816 = vpack.c.b16 %v1793, %v1792
    %v1817 = vpack.c.b16 %v1795, %v1794
    %v1818 = vpack.c.b16 %v1797, %v1796
    %v1819 = vpack.c.b16 %v1799, %v1798
    %v1820 = vpack.c.b16 %v1801, %v1800
    %v1821 = vpack.c.b16 %v1803, %v1802
    %v1822 = vpack.c.b16 %v1805, %v1804
    %v1823 = vpack.c.b16 %v1807, %v1806
    %1840 = vmatprep.subr.bf16.mxu0 0
    %1841 = vmatpush1.bf16.msra.mxu0 %v1808
    %1842 = vmatprep.subr.bf16.mxu0 0
    %1843 = vmatpush1.bf16.msra.mxu0 %v1809
    %1844 = vmatprep.subr.bf16.mxu0 0
    %1845 = vmatpush1.bf16.msra.mxu0 %v1810
    %1846 = vmatprep.subr.bf16.mxu0 0
    %1847 = vmatpush1.bf16.msra.mxu0 %v1811
    %1848 = vmatprep.subr.bf16.mxu0 0
    %1849 = vmatpush1.bf16.msra.mxu0 %v1812
    %1850 = vmatprep.subr.bf16.mxu0 0
    %1851 = vmatpush1.bf16.msra.mxu0 %v1813
    %1852 = vmatprep.subr.bf16.mxu0 0
    %1853 = vmatpush1.bf16.msra.mxu0 %v1814
    %1854 = vmatprep.subr.bf16.mxu0 0
    %1855 = vmatpush1.bf16.msra.mxu0 %v1815
    %1856 = vmatprep.subr.bf16.mxu0 0
    %1857 = vmatpush1.bf16.msra.mxu0 %v1816
    %1858 = vmatprep.subr.bf16.mxu0 0
    %1859 = vmatpush1.bf16.msra.mxu0 %v1817
    %1860 = vmatprep.subr.bf16.mxu0 0
    %1861 = vmatpush1.bf16.msra.mxu0 %v1818
    %1862 = vmatprep.subr.bf16.mxu0 0
    %1863 = vmatpush1.bf16.msra.mxu0 %v1819
    %1864 = vmatprep.subr.bf16.mxu0 0
    %1865 = vmatpush1.bf16.msra.mxu0 %v1820
    %1866 = vmatprep.subr.bf16.mxu0 0
    %1867 = vmatpush1.bf16.msra.mxu0 %v1821
    %1868 = vmatprep.subr.bf16.mxu0 0
    %1869 = vmatpush1.bf16.msra.mxu0 %v1822
    %1870 = vmatprep.subr.bf16.mxu0 0
    %1871 = vmatpush1.bf16.msra.mxu0 %v1823
    %1872 = vmatprep.mubr.bf16.mxu0 %v1642
    %1873 = vmatmul.mubr.bf16.gmra.mrb[0].mxu0 %v1641
    %v1874 = vpop.f32.mrb[0].mxu0
    %v1875 = vadd.f32 %v1742, %v1874
    %v1876 = vpop.f32.mrb[0].mxu0
    %v1877 = vpop.f32.mrb[0].mxu0
    %v1878 = vadd.f32 %v1742, %v1877
    %v1879 = vpop.f32.mrb[0].mxu0
    %1880 = vmatprep.mubr.bf16.mxu0 %v1644
    %1881 = vmatmul.mubr.bf16.gmra.mrb[0].mxu0 %v1643
    %v1882 = vpop.f32.mrb[0].mxu0
    %v1883 = vadd.f32 %v1742, %v1882
    %v1884 = vpop.f32.mrb[0].mxu0
    %v1885 = vpop.f32.mrb[0].mxu0
    %v1886 = vadd.f32 %v1742, %v1885
    %v1887 = vpop.f32.mrb[0].mxu0
    %1888 = vmatprep.mubr.bf16.mxu0 %v1646
    %1889 = vmatmul.mubr.bf16.gmra.mrb[0].mxu0 %v1645
    %v1890 = vpop.f32.mrb[0].mxu0
    %v1891 = vadd.f32 %v1742, %v1890
    %v1892 = vpop.f32.mrb[0].mxu0
    %v1893 = vpop.f32.mrb[0].mxu0
    %v1894 = vadd.f32 %v1742, %v1893
    %v1895 = vpop.f32.mrb[0].mxu0
    %1896 = vmatprep.mubr.bf16.mxu0 %v1648
    %1897 = vmatmul.mubr.bf16.gmra.mrb[0].mxu0 %v1647
    %v1898 = vpop.f32.mrb[0].mxu0
    %v1899 = vadd.f32 %v1742, %v1898
    %v1900 = vpop.f32.mrb[0].mxu0
    %v1901 = vpop.f32.mrb[0].mxu0
    %v1902 = vadd.f32 %v1742, %v1901
    %v1903 = vpop.f32.mrb[0].mxu0
    %1904 = vmatprep.mubr.bf16.mxu0 %v1650
    %1905 = vmatmul.mubr.bf16.gmra.mrb[0].mxu0 %v1649
    %v1906 = vpop.f32.mrb[0].mxu0
    %v1907 = vadd.f32 %v1742, %v1906
    %v1908 = vpop.f32.mrb[0].mxu0
    %v1909 = vpop.f32.mrb[0].mxu0
    %v1910 = vadd.f32 %v1742, %v1909
    %v1911 = vpop.f32.mrb[0].mxu0
    %1912 = vmatprep.mubr.bf16.mxu0 %v1652
    %1913 = vmatmul.mubr.bf16.gmra.mrb[0].mxu0 %v1651
    %v1914 = vpop.f32.mrb[0].mxu0
    %v1915 = vadd.f32 %v1742, %v1914
    %v1916 = vpop.f32.mrb[0].mxu0
    %v1917 = vpop.f32.mrb[0].mxu0
    %v1918 = vadd.f32 %v1742, %v1917
    %v1919 = vpop.f32.mrb[0].mxu0
    %1920 = vmatprep.mubr.bf16.mxu0 %v1654
    %1921 = vmatmul.mubr.bf16.gmra.mrb[0].mxu0 %v1653
    %v1922 = vpop.f32.mrb[0].mxu0
    %v1923 = vadd.f32 %v1742, %v1922
    %v1924 = vpop.f32.mrb[0].mxu0
    %v1925 = vpop.f32.mrb[0].mxu0
    %v1926 = vadd.f32 %v1742, %v1925
    %v1927 = vpop.f32.mrb[0].mxu0
    %1928 = vmatprep.mubr.bf16.mxu0 %v1656
    %1929 = vmatmul.mubr.bf16.gmra.mrb[0].mxu0 %v1655
    %v1930 = vpop.f32.mrb[0].mxu0
    %v1931 = vadd.f32 %v1742, %v1930
    %v1932 = vpop.f32.mrb[0].mxu0
    %v1933 = vpop.f32.mrb[0].mxu0
    %v1934 = vadd.f32 %v1742, %v1933
    %v1935 = vpop.f32.mrb[0].mxu0
    %1936 = vmatprep.mubr.bf16.mxu0 %v1658
    %1937 = vmatmul.mubr.bf16.gmra.mrb[0].mxu0 %v1657
    %v1938 = vpop.f32.mrb[0].mxu0
    %v1939 = vadd.f32 %v1742, %v1938
    %v1940 = vpop.f32.mrb[0].mxu0
    %v1941 = vpop.f32.mrb[0].mxu0
    %v1942 = vadd.f32 %v1742, %v1941
    %v1943 = vpop.f32.mrb[0].mxu0
    %1944 = vmatprep.mubr.bf16.mxu0 %v1660
    %1945 = vmatmul.mubr.bf16.gmra.mrb[0].mxu0 %v1659
    %v1946 = vpop.f32.mrb[0].mxu0
    %v1947 = vadd.f32 %v1742, %v1946
    %v1948 = vpop.f32.mrb[0].mxu0
    %v1949 = vpop.f32.mrb[0].mxu0
    %v1950 = vadd.f32 %v1742, %v1949
    %v1951 = vpop.f32.mrb[0].mxu0
    %1952 = vmatprep.mubr.bf16.mxu0 %v1662
    %1953 = vmatmul.mubr.bf16.gmra.mrb[0].mxu0 %v1661
    %v1954 = vpop.f32.mrb[0].mxu0
    %v1955 = vadd.f32 %v1742, %v1954
    %v1956 = vpop.f32.mrb[0].mxu0
    %v1957 = vpop.f32.mrb[0].mxu0
    %v1958 = vadd.f32 %v1742, %v1957
    %v1959 = vpop.f32.mrb[0].mxu0
    %1960 = vmatprep.mubr.bf16.mxu0 %v1664
    %1961 = vmatmul.mubr.bf16.gmra.mrb[0].mxu0 %v1663
    %v1962 = vpop.f32.mrb[0].mxu0
    %v1963 = vadd.f32 %v1742, %v1962
    %v1964 = vpop.f32.mrb[0].mxu0
    %v1965 = vpop.f32.mrb[0].mxu0
    %v1966 = vadd.f32 %v1742, %v1965
    %v1967 = vpop.f32.mrb[0].mxu0
    %1968 = vmatprep.mubr.bf16.mxu0 %v1666
    %1969 = vmatmul.mubr.bf16.gmra.mrb[0].mxu0 %v1665
    %v1970 = vpop.f32.mrb[0].mxu0
    %v1971 = vadd.f32 %v1742, %v1970
    %v1972 = vpop.f32.mrb[0].mxu0
    %v1973 = vpop.f32.mrb[0].mxu0
    %v1974 = vadd.f32 %v1742, %v1973
    %v1975 = vpop.f32.mrb[0].mxu0
    %1976 = vmatprep.mubr.bf16.mxu0 %v1668
    %1977 = vmatmul.mubr.bf16.gmra.mrb[0].mxu0 %v1667
    %v1978 = vpop.f32.mrb[0].mxu0
    %v1979 = vadd.f32 %v1742, %v1978
    %v1980 = vpop.f32.mrb[0].mxu0
    %v1981 = vpop.f32.mrb[0].mxu0
    %v1982 = vadd.f32 %v1742, %v1981
    %v1983 = vpop.f32.mrb[0].mxu0
    %1984 = vmatprep.mubr.bf16.mxu0 %v1670
    %1985 = vmatmul.mubr.bf16.gmra.mrb[0].mxu0 %v1669
    %v1986 = vpop.f32.mrb[0].mxu0
    %v1987 = vadd.f32 %v1742, %v1986
    %v1988 = vpop.f32.mrb[0].mxu0
    %v1989 = vpop.f32.mrb[0].mxu0
    %v1990 = vadd.f32 %v1742, %v1989
    %v1991 = vpop.f32.mrb[0].mxu0
    %1992 = vmatprep.mubr.bf16.mxu0 %v1672
    %1993 = vmatmul.mubr.bf16.gmra.mrb[0].mxu0 %v1671
    %v1994 = vpop.f32.mrb[0].mxu0
    %v1995 = vadd.f32 %v1742, %v1994
    %v1996 = vpop.f32.mrb[0].mxu0
    %v1997 = vpop.f32.mrb[0].mxu0
    %v1998 = vadd.f32 %v1742, %v1997
    %v1999 = vpop.f32.mrb[0].mxu0
    %2000 = vmatprep.mubr.bf16.mxu0 %v1674
    %2001 = vmatmul.mubr.bf16.gmra.mrb[0].mxu0 %v1673
    %v2002 = vpop.f32.mrb[0].mxu0
    %v2003 = vadd.f32 %v1742, %v2002
    %v2004 = vpop.f32.mrb[0].mxu0
    %v2005 = vpop.f32.mrb[0].mxu0
    %v2006 = vadd.f32 %v1742, %v2005
    %v2007 = vpop.f32.mrb[0].mxu0
    %2008 = vmatprep.mubr.bf16.mxu0 %v1676
    %2009 = vmatmul.mubr.bf16.gmra.mrb[0].mxu0 %v1675
    %v2010 = vpop.f32.mrb[0].mxu0
    %v2011 = vadd.f32 %v1742, %v2010
    %v2012 = vpop.f32.mrb[0].mxu0
    %v2013 = vpop.f32.mrb[0].mxu0
    %v2014 = vadd.f32 %v1742, %v2013
    %v2015 = vpop.f32.mrb[0].mxu0
    %2016 = vmatprep.mubr.bf16.mxu0 %v1678
    %2017 = vmatmul.mubr.bf16.gmra.mrb[0].mxu0 %v1677
    %v2018 = vpop.f32.mrb[0].mxu0
    %v2019 = vadd.f32 %v1742, %v2018
    %v2020 = vpop.f32.mrb[0].mxu0
    %v2021 = vpop.f32.mrb[0].mxu0
    %v2022 = vadd.f32 %v1742, %v2021
    %v2023 = vpop.f32.mrb[0].mxu0
    %2024 = vmatprep.mubr.bf16.mxu0 %v1680
    %2025 = vmatmul.mubr.bf16.gmra.mrb[0].mxu0 %v1679
    %v2026 = vpop.f32.mrb[0].mxu0
    %v2027 = vadd.f32 %v1742, %v2026
    %v2028 = vpop.f32.mrb[0].mxu0
    %v2029 = vpop.f32.mrb[0].mxu0
    %v2030 = vadd.f32 %v1742, %v2029
    %v2031 = vpop.f32.mrb[0].mxu0
    %2032 = vmatprep.mubr.bf16.mxu0 %v1682
    %2033 = vmatmul.mubr.bf16.gmra.mrb[0].mxu0 %v1681
    %v2034 = vpop.f32.mrb[0].mxu0
    %v2035 = vadd.f32 %v1742, %v2034
    %v2036 = vpop.f32.mrb[0].mxu0
    %v2037 = vpop.f32.mrb[0].mxu0
    %v2038 = vadd.f32 %v1742, %v2037
    %v2039 = vpop.f32.mrb[0].mxu0
    %2040 = vmatprep.mubr.bf16.mxu0 %v1684
    %2041 = vmatmul.mubr.bf16.gmra.mrb[0].mxu0 %v1683
    %v2042 = vpop.f32.mrb[0].mxu0
    %v2043 = vadd.f32 %v1742, %v2042
    %v2044 = vpop.f32.mrb[0].mxu0
    %v2045 = vpop.f32.mrb[0].mxu0
    %v2046 = vadd.f32 %v1742, %v2045
    %v2047 = vpop.f32.mrb[0].mxu0
    %2048 = vmatprep.mubr.bf16.mxu0 %v1686
    %2049 = vmatmul.mubr.bf16.gmra.mrb[0].mxu0 %v1685
    %v2050 = vpop.f32.mrb[0].mxu0
    %v2051 = vadd.f32 %v1742, %v2050
    %v2052 = vpop.f32.mrb[0].mxu0
    %v2053 = vpop.f32.mrb[0].mxu0
    %v2054 = vadd.f32 %v1742, %v2053
    %v2055 = vpop.f32.mrb[0].mxu0
    %2056 = vmatprep.mubr.bf16.mxu0 %v1688
    %2057 = vmatmul.mubr.bf16.gmra.mrb[0].mxu0 %v1687
    %v2058 = vpop.f32.mrb[0].mxu0
    %v2059 = vadd.f32 %v1742, %v2058
    %v2060 = vpop.f32.mrb[0].mxu0
    %v2061 = vpop.f32.mrb[0].mxu0
    %v2062 = vadd.f32 %v1742, %v2061
    %v2063 = vpop.f32.mrb[0].mxu0
    %2064 = vmatprep.mubr.bf16.mxu0 %v1690
    %2065 = vmatmul.mubr.bf16.gmra.mrb[0].mxu0 %v1689
    %v2066 = vpop.f32.mrb[0].mxu0
    %v2067 = vadd.f32 %v1742, %v2066
    %v2068 = vpop.f32.mrb[0].mxu0
    %v2069 = vpop.f32.mrb[0].mxu0
    %v2070 = vadd.f32 %v1742, %v2069
    %v2071 = vpop.f32.mrb[0].mxu0
    %2072 = vmatprep.mubr.bf16.mxu0 %v1692
    %2073 = vmatmul.mubr.bf16.gmra.mrb[0].mxu0 %v1691
    %v2074 = vpop.f32.mrb[0].mxu0
    %v2075 = vadd.f32 %v1742, %v2074
    %v2076 = vpop.f32.mrb[0].mxu0
    %v2077 = vpop.f32.mrb[0].mxu0
    %v2078 = vadd.f32 %v1742, %v2077
    %v2079 = vpop.f32.mrb[0].mxu0
    %2080 = vmatprep.mubr.bf16.mxu0 %v1694
    %2081 = vmatmul.mubr.bf16.gmra.mrb[0].mxu0 %v1693
    %v2082 = vpop.f32.mrb[0].mxu0
    %v2083 = vadd.f32 %v1742, %v2082
    %v2084 = vpop.f32.mrb[0].mxu0
    %v2085 = vpop.f32.mrb[0].mxu0
    %v2086 = vadd.f32 %v1742, %v2085
    %v2087 = vpop.f32.mrb[0].mxu0
    %2088 = vmatprep.mubr.bf16.mxu0 %v1696
    %2089 = vmatmul.mubr.bf16.gmra.mrb[0].mxu0 %v1695
    %v2090 = vpop.f32.mrb[0].mxu0
    %v2091 = vadd.f32 %v1742, %v2090
    %v2092 = vpop.f32.mrb[0].mxu0
    %v2093 = vpop.f32.mrb[0].mxu0
    %v2094 = vadd.f32 %v1742, %v2093
    %v2095 = vpop.f32.mrb[0].mxu0
    %2096 = vmatprep.mubr.bf16.mxu0 %v1698
    %2097 = vmatmul.mubr.bf16.gmra.mrb[0].mxu0 %v1697
    %v2098 = vpop.f32.mrb[0].mxu0
    %v2099 = vadd.f32 %v1742, %v2098
    %v2100 = vpop.f32.mrb[0].mxu0
    %v2101 = vpop.f32.mrb[0].mxu0
    %v2102 = vadd.f32 %v1742, %v2101
    %v2103 = vpop.f32.mrb[0].mxu0
    %2104 = vmatprep.mubr.bf16.mxu0 %v1700
    %2105 = vmatmul.mubr.bf16.gmra.mrb[0].mxu0 %v1699
    %v2106 = vpop.f32.mrb[0].mxu0
    %v2107 = vadd.f32 %v1742, %v2106
    %v2108 = vpop.f32.mrb[0].mxu0
    %v2109 = vpop.f32.mrb[0].mxu0
    %v2110 = vadd.f32 %v1742, %v2109
    %v2111 = vpop.f32.mrb[0].mxu0
    %2112 = vmatprep.mubr.bf16.mxu0 %v1702
    %2113 = vmatmul.mubr.bf16.gmra.mrb[0].mxu0 %v1701
    %v2114 = vpop.f32.mrb[0].mxu0
    %v2115 = vadd.f32 %v1742, %v2114
    %v2116 = vpop.f32.mrb[0].mxu0
    %v2117 = vpop.f32.mrb[0].mxu0
    %v2118 = vadd.f32 %v1742, %v2117
    %v2119 = vpop.f32.mrb[0].mxu0
    %2120 = vmatprep.mubr.bf16.mxu0 %v1704
    %2121 = vmatmul.mubr.bf16.gmra.mrb[0].mxu0 %v1703
    %v2122 = vpop.f32.mrb[0].mxu0
    %v2123 = vadd.f32 %v1742, %v2122
    %v2124 = vpop.f32.mrb[0].mxu0
    %v2125 = vpop.f32.mrb[0].mxu0
    %v2126 = vadd.f32 %v1742, %v2125
    %v2127 = vpop.f32.mrb[0].mxu0
    %2128 = vdwg.mxu0
    %v2129 = vmax.f32 %v1875, 0.0
    %v2130 = vmax.f32 %v1878, 0.0
    %v2131 = vmax.f32 %v1883, 0.0
    %v2132 = vmax.f32 %v1886, 0.0
    %v2133 = vmax.f32 %v1891, 0.0
    %v2134 = vmax.f32 %v1894, 0.0
    %v2135 = vmax.f32 %v1899, 0.0
    %v2136 = vmax.f32 %v1902, 0.0
    %v2137 = vmax.f32 %v1907, 0.0
    %v2138 = vmax.f32 %v1910, 0.0
    %v2139 = vmax.f32 %v1915, 0.0
    %v2140 = vmax.f32 %v1918, 0.0
    %v2141 = vmax.f32 %v1923, 0.0
    %v2142 = vmax.f32 %v1926, 0.0
    %v2143 = vmax.f32 %v1931, 0.0
    %v2144 = vmax.f32 %v1934, 0.0
    %v2145 = vmax.f32 %v1939, 0.0
    %v2146 = vmax.f32 %v1942, 0.0
    %v2147 = vmax.f32 %v1947, 0.0
    %v2148 = vmax.f32 %v1950, 0.0
    %v2149 = vmax.f32 %v1955, 0.0
    %v2150 = vmax.f32 %v1958, 0.0
    %v2151 = vmax.f32 %v1963, 0.0
    %v2152 = vmax.f32 %v1966, 0.0
    %v2153 = vmax.f32 %v1971, 0.0
    %v2154 = vmax.f32 %v1974, 0.0
    %v2155 = vmax.f32 %v1979, 0.0
    %v2156 = vmax.f32 %v1982, 0.0
    %v2157 = vmax.f32 %v1987, 0.0
    %v2158 = vmax.f32 %v1990, 0.0
    %v2159 = vmax.f32 %v1995, 0.0
    %v2160 = vmax.f32 %v1998, 0.0
    %v2161 = vmax.f32 %v2003, 0.0
    %v2162 = vmax.f32 %v2006, 0.0
    %v2163 = vmax.f32 %v2011, 0.0
    %v2164 = vmax.f32 %v2014, 0.0
    %v2165 = vmax.f32 %v2019, 0.0
    %v2166 = vmax.f32 %v2022, 0.0
    %v2167 = vmax.f32 %v2027, 0.0
    %v2168 = vmax.f32 %v2030, 0.0
    %v2169 = vmax.f32 %v2035, 0.0
    %v2170 = vmax.f32 %v2038, 0.0
    %v2171 = vmax.f32 %v2043, 0.0
    %v2172 = vmax.f32 %v2046, 0.0
    %v2173 = vmax.f32 %v2051, 0.0
    %v2174 = vmax.f32 %v2054, 0.0
    %v2175 = vmax.f32 %v2059, 0.0
    %v2176 = vmax.f32 %v2062, 0.0
    %v2177 = vmax.f32 %v2067, 0.0
    %v2178 = vmax.f32 %v2070, 0.0
    %v2179 = vmax.f32 %v2075, 0.0
    %v2180 = vmax.f32 %v2078, 0.0
    %v2181 = vmax.f32 %v2083, 0.0
    %v2182 = vmax.f32 %v2086, 0.0
    %v2183 = vmax.f32 %v2091, 0.0
    %v2184 = vmax.f32 %v2094, 0.0
    %v2185 = vmax.f32 %v2099, 0.0
    %v2186 = vmax.f32 %v2102, 0.0
    %v2187 = vmax.f32 %v2107, 0.0
    %v2188 = vmax.f32 %v2110, 0.0
    %v2189 = vmax.f32 %v2115, 0.0
    %v2190 = vmax.f32 %v2118, 0.0
    %v2191 = vmax.f32 %v2123, 0.0
    %v2192 = vmax.f32 %v2126, 0.0
    %v2193 = vpack.c.bf16 %v2130, %v2129
    %v2194 = vpack.c.bf16 %v2132, %v2131
    %v2195 = vpack.c.bf16 %v2134, %v2133
    %v2196 = vpack.c.bf16 %v2136, %v2135
    %v2197 = vpack.c.bf16 %v2138, %v2137
    %v2198 = vpack.c.bf16 %v2140, %v2139
    %v2199 = vpack.c.bf16 %v2142, %v2141
    %v2200 = vpack.c.bf16 %v2144, %v2143
    %v2201 = vpack.c.bf16 %v2146, %v2145
    %v2202 = vpack.c.bf16 %v2148, %v2147
    %v2203 = vpack.c.bf16 %v2150, %v2149
    %v2204 = vpack.c.bf16 %v2152, %v2151
    %v2205 = vpack.c.bf16 %v2154, %v2153
    %v2206 = vpack.c.bf16 %v2156, %v2155
    %v2207 = vpack.c.bf16 %v2158, %v2157
    %v2208 = vpack.c.bf16 %v2160, %v2159
    %v2209 = vpack.c.bf16 %v2162, %v2161
    %v2210 = vpack.c.bf16 %v2164, %v2163
    %v2211 = vpack.c.bf16 %v2166, %v2165
    %v2212 = vpack.c.bf16 %v2168, %v2167
    %v2213 = vpack.c.bf16 %v2170, %v2169
    %v2214 = vpack.c.bf16 %v2172, %v2171
    %v2215 = vpack.c.bf16 %v2174, %v2173
    %v2216 = vpack.c.bf16 %v2176, %v2175
    %v2217 = vpack.c.bf16 %v2178, %v2177
    %v2218 = vpack.c.bf16 %v2180, %v2179
    %v2219 = vpack.c.bf16 %v2182, %v2181
    %v2220 = vpack.c.bf16 %v2184, %v2183
    %v2221 = vpack.c.bf16 %v2186, %v2185
    %v2222 = vpack.c.bf16 %v2188, %v2187
    %v2223 = vpack.c.bf16 %v2190, %v2189
    %v2224 = vpack.c.bf16 %v2192, %v2191
    %v2225 = vld [vmem:[#allocation4] sm:$0xf]
    %v2226 = vld [vmem:[#allocation4 + $0x4] sm:$0xf]
    %v2227 = vld [vmem:[#allocation4 + $0x8] sm:$0xf]
    %v2228 = vld [vmem:[#allocation4 + $0xc] sm:$0xf]
    %v2229 = vld [vmem:[#allocation4 + $0x10] sm:$0xf]
    %v2230 = vld [vmem:[#allocation4 + $0x14] sm:$0xf]
    %v2231 = vld [vmem:[#allocation4 + $0x18] sm:$0xf]
    %v2232 = vld [vmem:[#allocation4 + $0x1c] sm:$0xf]
    %v2233 = vld [vmem:[#allocation4 + $0x20] sm:$0xf]
    %v2234 = vld [vmem:[#allocation4 + $0x24] sm:$0xf]
    %v2235 = vld [vmem:[#allocation4 + $0x28] sm:$0xf]
    %v2236 = vld [vmem:[#allocation4 + $0x2c] sm:$0xf]
    %v2237 = vld [vmem:[#allocation4 + $0x30] sm:$0xf]
    %v2238 = vld [vmem:[#allocation4 + $0x34] sm:$0xf]
    %v2239 = vld [vmem:[#allocation4 + $0x38] sm:$0xf]
    %v2240 = vld [vmem:[#allocation4 + $0x3c] sm:$0xf]
    %v2241 = vld [vmem:[%s8] sm:$0x1]
    %v2243 = vlaneseq
    %v2244 = vshrl.u32 %v2243, 7
    %v2245 = vsub.s32 0, %v2244
    %v2246 = vrot.slane %v2241, %v2245
    %v2264 = vunpack.c.l.b16 %v2225
    %v2265 = vunpack.c.l.b16 %v2226
    %v2266 = vunpack.c.l.b16 %v2227
    %v2267 = vunpack.c.l.b16 %v2228
    %v2268 = vunpack.c.l.b16 %v2229
    %v2269 = vunpack.c.l.b16 %v2230
    %v2270 = vunpack.c.l.b16 %v2231
    %v2271 = vunpack.c.l.b16 %v2232
    %v2272 = vunpack.c.l.b16 %v2233
    %v2273 = vunpack.c.l.b16 %v2234
    %v2274 = vunpack.c.l.b16 %v2235
    %v2275 = vunpack.c.l.b16 %v2236
    %v2276 = vunpack.c.l.b16 %v2237
    %v2277 = vunpack.c.l.b16 %v2238
    %v2278 = vunpack.c.l.b16 %v2239
    %v2279 = vunpack.c.l.b16 %v2240
    %v2280 = vpack.c.b16 %v2265, %v2264
    %v2281 = vpack.c.b16 %v2267, %v2266
    %v2282 = vpack.c.b16 %v2269, %v2268
    %v2283 = vpack.c.b16 %v2271, %v2270
    %v2284 = vpack.c.b16 %v2273, %v2272
    %v2285 = vpack.c.b16 %v2275, %v2274
    %v2286 = vpack.c.b16 %v2277, %v2276
    %v2287 = vpack.c.b16 %v2279, %v2278
    %2296 = vmatprep.subr.bf16.mxu0 0
    %2297 = vmatpush1.bf16.msra.mxu0 %v2280
    %2298 = vmatprep.subr.bf16.mxu0 0
    %2299 = vmatpush1.bf16.msra.mxu0 %v2281
    %2300 = vmatprep.subr.bf16.mxu0 0
    %2301 = vmatpush1.bf16.msra.mxu0 %v2282
    %2302 = vmatprep.subr.bf16.mxu0 0
    %2303 = vmatpush1.bf16.msra.mxu0 %v2283
    %2304 = vmatprep.subr.bf16.mxu0 0
    %2305 = vmatpush1.bf16.msra.mxu0 %v2284
    %2306 = vmatprep.subr.bf16.mxu0 0
    %2307 = vmatpush1.bf16.msra.mxu0 %v2285
    %2308 = vmatprep.subr.bf16.mxu0 0
    %2309 = vmatpush1.bf16.msra.mxu0 %v2286
    %2310 = vmatprep.subr.bf16.mxu0 0
    %2311 = vmatpush1.bf16.msra.mxu0 %v2287
    %2312 = vmatprep.subr.bf16.mxu0 0
    %2313 = vmatpush1.bf16.msra.mxu0 0
    %2314 = vmatprep.subr.bf16.mxu0 0
    %2315 = vmatpush1.bf16.msra.mxu0 0
    %2316 = vmatprep.subr.bf16.mxu0 0
    %2317 = vmatpush1.bf16.msra.mxu0 0
    %2318 = vmatprep.subr.bf16.mxu0 0
    %2319 = vmatpush1.bf16.msra.mxu0 0
    %2320 = vmatprep.subr.bf16.mxu0 0
    %2321 = vmatpush1.bf16.msra.mxu0 0
    %2322 = vmatprep.subr.bf16.mxu0 0
    %2323 = vmatpush1.bf16.msra.mxu0 0
    %2324 = vmatprep.subr.bf16.mxu0 0
    %2325 = vmatpush1.bf16.msra.mxu0 0
    %2326 = vmatprep.subr.bf16.mxu0 0
    %2327 = vmatpush1.bf16.msra.mxu0 0
    %2328 = vmatprep.mubr.bf16.mxu0 0
    %2329 = vmatmul.mubr.bf16.gmra.mrb[0].mxu0 %v2193
    %v2330 = vpop.f32.mrb[0].mxu0
    %v2331 = vadd.f32 %v2246, %v2330
    %v2332 = vpop.f32.mrb[0].mxu0
    %v2333 = vpop.f32.mrb[0].mxu0
    %v2334 = vadd.f32 %v2246, %v2333
    %v2335 = vpop.f32.mrb[0].mxu0
    %2336 = vmatprep.mubr.bf16.mxu0 0
    %2337 = vmatmul.mubr.bf16.gmra.mrb[0].mxu0 %v2194
    %v2338 = vpop.f32.mrb[0].mxu0
    %v2339 = vadd.f32 %v2246, %v2338
    %v2340 = vpop.f32.mrb[0].mxu0
    %v2341 = vpop.f32.mrb[0].mxu0
    %v2342 = vadd.f32 %v2246, %v2341
    %v2343 = vpop.f32.mrb[0].mxu0
    %2344 = vmatprep.mubr.bf16.mxu0 0
    %2345 = vmatmul.mubr.bf16.gmra.mrb[0].mxu0 %v2195
    %v2346 = vpop.f32.mrb[0].mxu0
    %v2347 = vadd.f32 %v2246, %v2346
    %v2348 = vpop.f32.mrb[0].mxu0
    %v2349 = vpop.f32.mrb[0].mxu0
    %v2350 = vadd.f32 %v2246, %v2349
    %v2351 = vpop.f32.mrb[0].mxu0
    %2352 = vmatprep.mubr.bf16.mxu0 0
    %2353 = vmatmul.mubr.bf16.gmra.mrb[0].mxu0 %v2196
    %v2354 = vpop.f32.mrb[0].mxu0
    %v2355 = vadd.f32 %v2246, %v2354
    %v2356 = vpop.f32.mrb[0].mxu0
    %v2357 = vpop.f32.mrb[0].mxu0
    %v2358 = vadd.f32 %v2246, %v2357
    %v2359 = vpop.f32.mrb[0].mxu0
    %2360 = vmatprep.mubr.bf16.mxu0 0
    %2361 = vmatmul.mubr.bf16.gmra.mrb[0].mxu0 %v2197
    %v2362 = vpop.f32.mrb[0].mxu0
    %v2363 = vadd.f32 %v2246, %v2362
    %v2364 = vpop.f32.mrb[0].mxu0
    %v2365 = vpop.f32.mrb[0].mxu0
    %v2366 = vadd.f32 %v2246, %v2365
    %v2367 = vpop.f32.mrb[0].mxu0
    %2368 = vmatprep.mubr.bf16.mxu0 0
    %2369 = vmatmul.mubr.bf16.gmra.mrb[0].mxu0 %v2198
    %v2370 = vpop.f32.mrb[0].mxu0
    %v2371 = vadd.f32 %v2246, %v2370
    %v2372 = vpop.f32.mrb[0].mxu0
    %v2373 = vpop.f32.mrb[0].mxu0
    %v2374 = vadd.f32 %v2246, %v2373
    %v2375 = vpop.f32.mrb[0].mxu0
    %2376 = vmatprep.mubr.bf16.mxu0 0
    %2377 = vmatmul.mubr.bf16.gmra.mrb[0].mxu0 %v2199
    %v2378 = vpop.f32.mrb[0].mxu0
    %v2379 = vadd.f32 %v2246, %v2378
    %v2380 = vpop.f32.mrb[0].mxu0
    %v2381 = vpop.f32.mrb[0].mxu0
    %v2382 = vadd.f32 %v2246, %v2381
    %v2383 = vpop.f32.mrb[0].mxu0
    %2384 = vmatprep.mubr.bf16.mxu0 0
    %2385 = vmatmul.mubr.bf16.gmra.mrb[0].mxu0 %v2200
    %v2386 = vpop.f32.mrb[0].mxu0
    %v2387 = vadd.f32 %v2246, %v2386
    %v2388 = vpop.f32.mrb[0].mxu0
    %v2389 = vpop.f32.mrb[0].mxu0
    %v2390 = vadd.f32 %v2246, %v2389
    %v2391 = vpop.f32.mrb[0].mxu0
    %2392 = vmatprep.mubr.bf16.mxu0 0
    %2393 = vmatmul.mubr.bf16.gmra.mrb[0].mxu0 %v2201
    %v2394 = vpop.f32.mrb[0].mxu0
    %v2395 = vadd.f32 %v2246, %v2394
    %v2396 = vpop.f32.mrb[0].mxu0
    %v2397 = vpop.f32.mrb[0].mxu0
    %v2398 = vadd.f32 %v2246, %v2397
    %v2399 = vpop.f32.mrb[0].mxu0
    %2400 = vmatprep.mubr.bf16.mxu0 0
    %2401 = vmatmul.mubr.bf16.gmra.mrb[0].mxu0 %v2202
    %v2402 = vpop.f32.mrb[0].mxu0
    %v2403 = vadd.f32 %v2246, %v2402
    %v2404 = vpop.f32.mrb[0].mxu0
    %v2405 = vpop.f32.mrb[0].mxu0
    %v2406 = vadd.f32 %v2246, %v2405
    %v2407 = vpop.f32.mrb[0].mxu0
    %2408 = vmatprep.mubr.bf16.mxu0 0
    %2409 = vmatmul.mubr.bf16.gmra.mrb[0].mxu0 %v2203
    %v2410 = vpop.f32.mrb[0].mxu0
    %v2411 = vadd.f32 %v2246, %v2410
    %v2412 = vpop.f32.mrb[0].mxu0
    %v2413 = vpop.f32.mrb[0].mxu0
    %v2414 = vadd.f32 %v2246, %v2413
    %v2415 = vpop.f32.mrb[0].mxu0
    %2416 = vmatprep.mubr.bf16.mxu0 0
    %2417 = vmatmul.mubr.bf16.gmra.mrb[0].mxu0 %v2204
    %v2418 = vpop.f32.mrb[0].mxu0
    %v2419 = vadd.f32 %v2246, %v2418
    %v2420 = vpop.f32.mrb[0].mxu0
    %v2421 = vpop.f32.mrb[0].mxu0
    %v2422 = vadd.f32 %v2246, %v2421
    %v2423 = vpop.f32.mrb[0].mxu0
    %2424 = vmatprep.mubr.bf16.mxu0 0
    %2425 = vmatmul.mubr.bf16.gmra.mrb[0].mxu0 %v2205
    %v2426 = vpop.f32.mrb[0].mxu0
    %v2427 = vadd.f32 %v2246, %v2426
    %v2428 = vpop.f32.mrb[0].mxu0
    %v2429 = vpop.f32.mrb[0].mxu0
    %v2430 = vadd.f32 %v2246, %v2429
    %v2431 = vpop.f32.mrb[0].mxu0
    %2432 = vmatprep.mubr.bf16.mxu0 0
    %2433 = vmatmul.mubr.bf16.gmra.mrb[0].mxu0 %v2206
    %v2434 = vpop.f32.mrb[0].mxu0
    %v2435 = vadd.f32 %v2246, %v2434
    %v2436 = vpop.f32.mrb[0].mxu0
    %v2437 = vpop.f32.mrb[0].mxu0
    %v2438 = vadd.f32 %v2246, %v2437
    %v2439 = vpop.f32.mrb[0].mxu0
    %2440 = vmatprep.mubr.bf16.mxu0 0
    %2441 = vmatmul.mubr.bf16.gmra.mrb[0].mxu0 %v2207
    %v2442 = vpop.f32.mrb[0].mxu0
    %v2443 = vadd.f32 %v2246, %v2442
    %v2444 = vpop.f32.mrb[0].mxu0
    %v2445 = vpop.f32.mrb[0].mxu0
    %v2446 = vadd.f32 %v2246, %v2445
    %v2447 = vpop.f32.mrb[0].mxu0
    %2448 = vmatprep.mubr.bf16.mxu0 0
    %2449 = vmatmul.mubr.bf16.gmra.mrb[0].mxu0 %v2208
    %v2450 = vpop.f32.mrb[0].mxu0
    %v2451 = vadd.f32 %v2246, %v2450
    %v2452 = vpop.f32.mrb[0].mxu0
    %v2453 = vpop.f32.mrb[0].mxu0
    %v2454 = vadd.f32 %v2246, %v2453
    %v2455 = vpop.f32.mrb[0].mxu0
    %2456 = vmatprep.mubr.bf16.mxu0 0
    %2457 = vmatmul.mubr.bf16.gmra.mrb[0].mxu0 %v2209
    %v2458 = vpop.f32.mrb[0].mxu0
    %v2459 = vadd.f32 %v2246, %v2458
    %v2460 = vpop.f32.mrb[0].mxu0
    %v2461 = vpop.f32.mrb[0].mxu0
    %v2462 = vadd.f32 %v2246, %v2461
    %v2463 = vpop.f32.mrb[0].mxu0
    %2464 = vmatprep.mubr.bf16.mxu0 0
    %2465 = vmatmul.mubr.bf16.gmra.mrb[0].mxu0 %v2210
    %v2466 = vpop.f32.mrb[0].mxu0
    %v2467 = vadd.f32 %v2246, %v2466
    %v2468 = vpop.f32.mrb[0].mxu0
    %v2469 = vpop.f32.mrb[0].mxu0
    %v2470 = vadd.f32 %v2246, %v2469
    %v2471 = vpop.f32.mrb[0].mxu0
    %2472 = vmatprep.mubr.bf16.mxu0 0
    %2473 = vmatmul.mubr.bf16.gmra.mrb[0].mxu0 %v2211
    %v2474 = vpop.f32.mrb[0].mxu0
    %v2475 = vadd.f32 %v2246, %v2474
    %v2476 = vpop.f32.mrb[0].mxu0
    %v2477 = vpop.f32.mrb[0].mxu0
    %v2478 = vadd.f32 %v2246, %v2477
    %v2479 = vpop.f32.mrb[0].mxu0
    %2480 = vmatprep.mubr.bf16.mxu0 0
    %2481 = vmatmul.mubr.bf16.gmra.mrb[0].mxu0 %v2212
    %v2482 = vpop.f32.mrb[0].mxu0
    %v2483 = vadd.f32 %v2246, %v2482
    %v2484 = vpop.f32.mrb[0].mxu0
    %v2485 = vpop.f32.mrb[0].mxu0
    %v2486 = vadd.f32 %v2246, %v2485
    %v2487 = vpop.f32.mrb[0].mxu0
    %2488 = vmatprep.mubr.bf16.mxu0 0
    %2489 = vmatmul.mubr.bf16.gmra.mrb[0].mxu0 %v2213
    %v2490 = vpop.f32.mrb[0].mxu0
    %v2491 = vadd.f32 %v2246, %v2490
    %v2492 = vpop.f32.mrb[0].mxu0
    %v2493 = vpop.f32.mrb[0].mxu0
    %v2494 = vadd.f32 %v2246, %v2493
    %v2495 = vpop.f32.mrb[0].mxu0
    %2496 = vmatprep.mubr.bf16.mxu0 0
    %2497 = vmatmul.mubr.bf16.gmra.mrb[0].mxu0 %v2214
    %v2498 = vpop.f32.mrb[0].mxu0
    %v2499 = vadd.f32 %v2246, %v2498
    %v2500 = vpop.f32.mrb[0].mxu0
    %v2501 = vpop.f32.mrb[0].mxu0
    %v2502 = vadd.f32 %v2246, %v2501
    %v2503 = vpop.f32.mrb[0].mxu0
    %2504 = vmatprep.mubr.bf16.mxu0 0
    %2505 = vmatmul.mubr.bf16.gmra.mrb[0].mxu0 %v2215
    %v2506 = vpop.f32.mrb[0].mxu0
    %v2507 = vadd.f32 %v2246, %v2506
    %v2508 = vpop.f32.mrb[0].mxu0
    %v2509 = vpop.f32.mrb[0].mxu0
    %v2510 = vadd.f32 %v2246, %v2509
    %v2511 = vpop.f32.mrb[0].mxu0
    %2512 = vmatprep.mubr.bf16.mxu0 0
    %2513 = vmatmul.mubr.bf16.gmra.mrb[0].mxu0 %v2216
    %v2514 = vpop.f32.mrb[0].mxu0
    %v2515 = vadd.f32 %v2246, %v2514
    %v2516 = vpop.f32.mrb[0].mxu0
    %v2517 = vpop.f32.mrb[0].mxu0
    %v2518 = vadd.f32 %v2246, %v2517
    %v2519 = vpop.f32.mrb[0].mxu0
    %2520 = vmatprep.mubr.bf16.mxu0 0
    %2521 = vmatmul.mubr.bf16.gmra.mrb[0].mxu0 %v2217
    %v2522 = vpop.f32.mrb[0].mxu0
    %v2523 = vadd.f32 %v2246, %v2522
    %v2524 = vpop.f32.mrb[0].mxu0
    %v2525 = vpop.f32.mrb[0].mxu0
    %v2526 = vadd.f32 %v2246, %v2525
    %v2527 = vpop.f32.mrb[0].mxu0
    %2528 = vmatprep.mubr.bf16.mxu0 0
    %2529 = vmatmul.mubr.bf16.gmra.mrb[0].mxu0 %v2218
    %v2530 = vpop.f32.mrb[0].mxu0
    %v2531 = vadd.f32 %v2246, %v2530
    %v2532 = vpop.f32.mrb[0].mxu0
    %v2533 = vpop.f32.mrb[0].mxu0
    %v2534 = vadd.f32 %v2246, %v2533
    %v2535 = vpop.f32.mrb[0].mxu0
    %2536 = vmatprep.mubr.bf16.mxu0 0
    %2537 = vmatmul.mubr.bf16.gmra.mrb[0].mxu0 %v2219
    %v2538 = vpop.f32.mrb[0].mxu0
    %v2539 = vadd.f32 %v2246, %v2538
    %v2540 = vpop.f32.mrb[0].mxu0
    %v2541 = vpop.f32.mrb[0].mxu0
    %v2542 = vadd.f32 %v2246, %v2541
    %v2543 = vpop.f32.mrb[0].mxu0
    %2544 = vmatprep.mubr.bf16.mxu0 0
    %2545 = vmatmul.mubr.bf16.gmra.mrb[0].mxu0 %v2220
    %v2546 = vpop.f32.mrb[0].mxu0
    %v2547 = vadd.f32 %v2246, %v2546
    %v2548 = vpop.f32.mrb[0].mxu0
    %v2549 = vpop.f32.mrb[0].mxu0
    %v2550 = vadd.f32 %v2246, %v2549
    %v2551 = vpop.f32.mrb[0].mxu0
    %2552 = vmatprep.mubr.bf16.mxu0 0
    %2553 = vmatmul.mubr.bf16.gmra.mrb[0].mxu0 %v2221
    %v2554 = vpop.f32.mrb[0].mxu0
    %v2555 = vadd.f32 %v2246, %v2554
    %v2556 = vpop.f32.mrb[0].mxu0
    %v2557 = vpop.f32.mrb[0].mxu0
    %v2558 = vadd.f32 %v2246, %v2557
    %v2559 = vpop.f32.mrb[0].mxu0
    %2560 = vmatprep.mubr.bf16.mxu0 0
    %2561 = vmatmul.mubr.bf16.gmra.mrb[0].mxu0 %v2222
    %v2562 = vpop.f32.mrb[0].mxu0
    %v2563 = vadd.f32 %v2246, %v2562
    %v2564 = vpop.f32.mrb[0].mxu0
    %v2565 = vpop.f32.mrb[0].mxu0
    %v2566 = vadd.f32 %v2246, %v2565
    %v2567 = vpop.f32.mrb[0].mxu0
    %2568 = vmatprep.mubr.bf16.mxu0 0
    %2569 = vmatmul.mubr.bf16.gmra.mrb[0].mxu0 %v2223
    %v2570 = vpop.f32.mrb[0].mxu0
    %v2571 = vadd.f32 %v2246, %v2570
    %v2572 = vpop.f32.mrb[0].mxu0
    %v2573 = vpop.f32.mrb[0].mxu0
    %v2574 = vadd.f32 %v2246, %v2573
    %v2575 = vpop.f32.mrb[0].mxu0
    %2576 = vmatprep.mubr.bf16.mxu0 0
    %2577 = vmatmul.mubr.bf16.gmra.mrb[0].mxu0 %v2224
    %v2578 = vpop.f32.mrb[0].mxu0
    %v2579 = vadd.f32 %v2246, %v2578
    %v2580 = vpop.f32.mrb[0].mxu0
    %v2581 = vpop.f32.mrb[0].mxu0
    %v2582 = vadd.f32 %v2246, %v2581
    %v2583 = vpop.f32.mrb[0].mxu0
    %2584 = vdwg.mxu0
    %2585 = vst [vmem:[%s9] sm:$0xff] %v2331
    %2586 = vst [vmem:[%s9 + $0x8] sm:$0xff] %v2334
    %2587 = vst [vmem:[%s9 + $0x10] sm:$0xff] %v2339
    %2588 = vst [vmem:[%s9 + $0x18] sm:$0xff] %v2342
    %2589 = vst [vmem:[%s9 + $0x20] sm:$0xff] %v2347
    %2590 = vst [vmem:[%s9 + $0x28] sm:$0xff] %v2350
    %2591 = vst [vmem:[%s9 + $0x30] sm:$0xff] %v2355
    %2592 = vst [vmem:[%s9 + $0x38] sm:$0xff] %v2358
    %2593 = vst [vmem:[%s9 + $0x40] sm:$0xff] %v2363
    %2594 = vst [vmem:[%s9 + $0x48] sm:$0xff] %v2366
    %2595 = vst [vmem:[%s9 + $0x50] sm:$0xff] %v2371
    %2596 = vst [vmem:[%s9 + $0x58] sm:$0xff] %v2374
    %2597 = vst [vmem:[%s9 + $0x60] sm:$0xff] %v2379
    %2598 = vst [vmem:[%s9 + $0x68] sm:$0xff] %v2382
    %2599 = vst [vmem:[%s9 + $0x70] sm:$0xff] %v2387
    %2600 = vst [vmem:[%s9 + $0x78] sm:$0xff] %v2390
    %2601 = vst [vmem:[%s9 + $0x80] sm:$0xff] %v2395
    %2602 = vst [vmem:[%s9 + $0x88] sm:$0xff] %v2398
    %2603 = vst [vmem:[%s9 + $0x90] sm:$0xff] %v2403
    %2604 = vst [vmem:[%s9 + $0x98] sm:$0xff] %v2406
    %2605 = vst [vmem:[%s9 + $0xa0] sm:$0xff] %v2411
    %2606 = vst [vmem:[%s9 + $0xa8] sm:$0xff] %v2414
    %2607 = vst [vmem:[%s9 + $0xb0] sm:$0xff] %v2419
    %2608 = vst [vmem:[%s9 + $0xb8] sm:$0xff] %v2422
    %2609 = vst [vmem:[%s9 + $0xc0] sm:$0xff] %v2427
    %2610 = vst [vmem:[%s9 + $0xc8] sm:$0xff] %v2430
    %2611 = vst [vmem:[%s9 + $0xd0] sm:$0xff] %v2435
    %2612 = vst [vmem:[%s9 + $0xd8] sm:$0xff] %v2438
    %2613 = vst [vmem:[%s9 + $0xe0] sm:$0xff] %v2443
    %2614 = vst [vmem:[%s9 + $0xe8] sm:$0xff] %v2446
    %2615 = vst [vmem:[%s9 + $0xf0] sm:$0xff] %v2451
    %2616 = vst [vmem:[%s9 + $0xf8] sm:$0xff] %v2454
    %2617 = vst [vmem:[%s9 + $0x100] sm:$0xff] %v2459
    %2618 = vst [vmem:[%s9 + $0x108] sm:$0xff] %v2462
    %2619 = vst [vmem:[%s9 + $0x110] sm:$0xff] %v2467
    %2620 = vst [vmem:[%s9 + $0x118] sm:$0xff] %v2470
    %2621 = vst [vmem:[%s9 + $0x120] sm:$0xff] %v2475
    %2622 = vst [vmem:[%s9 + $0x128] sm:$0xff] %v2478
    %2623 = vst [vmem:[%s9 + $0x130] sm:$0xff] %v2483
    %2624 = vst [vmem:[%s9 + $0x138] sm:$0xff] %v2486
    %2625 = vst [vmem:[%s9 + $0x140] sm:$0xff] %v2491
    %2626 = vst [vmem:[%s9 + $0x148] sm:$0xff] %v2494
    %2627 = vst [vmem:[%s9 + $0x150] sm:$0xff] %v2499
    %2628 = vst [vmem:[%s9 + $0x158] sm:$0xff] %v2502
    %2629 = vst [vmem:[%s9 + $0x160] sm:$0xff] %v2507
    %2630 = vst [vmem:[%s9 + $0x168] sm:$0xff] %v2510
    %2631 = vst [vmem:[%s9 + $0x170] sm:$0xff] %v2515
    %2632 = vst [vmem:[%s9 + $0x178] sm:$0xff] %v2518
    %2633 = vst [vmem:[%s9 + $0x180] sm:$0xff] %v2523
    %2634 = vst [vmem:[%s9 + $0x188] sm:$0xff] %v2526
    %2635 = vst [vmem:[%s9 + $0x190] sm:$0xff] %v2531
    %2636 = vst [vmem:[%s9 + $0x198] sm:$0xff] %v2534
    %2637 = vst [vmem:[%s9 + $0x1a0] sm:$0xff] %v2539
    %2638 = vst [vmem:[%s9 + $0x1a8] sm:$0xff] %v2542
    %2639 = vst [vmem:[%s9 + $0x1b0] sm:$0xff] %v2547
    %2640 = vst [vmem:[%s9 + $0x1b8] sm:$0xff] %v2550
    %2641 = vst [vmem:[%s9 + $0x1c0] sm:$0xff] %v2555
    %2642 = vst [vmem:[%s9 + $0x1c8] sm:$0xff] %v2558
    %2643 = vst [vmem:[%s9 + $0x1d0] sm:$0xff] %v2563
    %2644 = vst [vmem:[%s9 + $0x1d8] sm:$0xff] %v2566
    %2645 = vst [vmem:[%s9 + $0x1e0] sm:$0xff] %v2571
    %2646 = vst [vmem:[%s9 + $0x1e8] sm:$0xff] %v2574
    %2647 = vst [vmem:[%s9 + $0x1f0] sm:$0xff] %v2579
    %2648 = vst [vmem:[%s9 + $0x1f8] sm:$0xff] %v2582
    // Predicated region
    $region46: #{qnetwork_forward.1} parent=1 // pred_check
      _
    $region47: #{qnetwork_forward.1} parent=1 // pred_check_branch
      %2650 = sbr.rel (0) target = $region49
    $region48: #{qnetwork_forward.1} parent=1 // pred_region
      _
    $region49: #{qnetwork_forward.1} parent=1 // pred_fallthru
      _
    // Predicated region
    $region50: #{qnetwork_forward.1} parent=1 // pred_check
      _
    $region51: #{qnetwork_forward.1} parent=1 // pred_check_branch
      %2652 = sbr.rel (0) target = $region53
    $region52: #{qnetwork_forward.1} parent=1 // pred_region
      _
    $region53: #{qnetwork_forward.1} parent=1 // pred_fallthru
      _
    %2653 = vsyncpa [#allocation3], 1
    %2654 = vsyncpa [#allocation5], 1

</llo_original>
